<compile_context>
chip_gen: v7x
topology: tpu7x:2x2x1
jax: 0.10.0
libtpu: 0.0.40
codegen_flags: <defaults>
</compile_context>

<pallas_src>
import numpy as np
import jax
import jax.numpy as jnp
from jax.experimental import pallas as pl
from jax.experimental.pallas import tpu as pltpu

# ---------------- synthetic config (mirrors opt.arch.*) ----------------
FORCE_SYMMETRY = True
PROJ_LATENT_DIM = 16
N_HIDDEN = 3                 # n_hidden_layers
N_CHANNEL = 32               # n_channels
SKIP_IN = (2,)               # skip_connection
POSENC_RES = 4               # pos_enc
INIT_SPHERE_RADIUS = 0.5
GEOMETRIC_INIT = True
# weight_norm at init is numerically identical to the plain Linear -> folded in.

INPUT_CH = 3 + 3 * 2 * POSENC_RES        # include_input + sin/cos per freq
DIMS = [3 + PROJ_LATENT_DIM] + [N_CHANNEL] * N_HIDDEN + [1 + N_CHANNEL]
DIMS[0] += INPUT_CH - 3                  # posenc expands the point channels
NUM_LAYERS = len(DIMS)
FREQS = tuple(float(2.0 ** i) for i in range(POSENC_RES))   # log_sampling
INV_SQRT2 = float(1.0 / np.sqrt(2.0))
NF = 3 * POSENC_RES                      # rows of the posenc block P = E @ pts

assert 0 not in SKIP_IN and (NUM_LAYERS - 2) not in SKIP_IN


# ------------- weight-slab layout (static, 8-row aligned segments) -------------
# Everything is stored (out, in): segment rows = output channels (sublanes),
# segment cols = input channels (lanes, <= N_CHANNEL).
def _build_segments():
    segs, off, max_cols = {}, 0, 1

    def add(name, rows, cols):
        nonlocal off, max_cols
        segs[name] = (off, rows, cols)
        off += ((rows + 7) // 8) * 8          # keep every segment sublane-aligned
        max_cols = max(max_cols, cols)

    add("E", NF, 3)                           # posenc expansion P = E @ pts
    add("L0_pts", DIMS[1], 3); add("L0_sin", DIMS[1], NF); add("L0_cos", DIMS[1], NF)
    add("L0_lat", DIMS[1], PROJ_LATENT_DIM); add("L0_b", DIMS[1], 1)
    for l in range(1, NUM_LAYERS - 2):
        add(f"L{l}_x", DIMS[l + 1], DIMS[l])
        if l in SKIP_IN:
            add(f"L{l}_pts", DIMS[l + 1], 3); add(f"L{l}_sin", DIMS[l + 1], NF)
            add(f"L{l}_cos", DIMS[l + 1], NF); add(f"L{l}_lat", DIMS[l + 1], PROJ_LATENT_DIM)
        add(f"L{l}_b", DIMS[l + 1], 1)
    add("W3", DIMS[-1], DIMS[-2])
    add("b3", DIMS[-1], 1)
    return segs, off, max_cols


SEG, SLAB_ROWS, SLAB_COLS = _build_segments()


# ---------------- Pallas kernel ----------------
def _softplus100(v):
    # PyTorch Softplus(beta=100, threshold=20); exp overflow -> inf is discarded
    # by the where (never NaN), matching PyTorch.
    bv = 100.0 * v
    return jnp.where(bv > 20.0, v, jnp.log1p(jnp.exp(bv)) * 0.01)


def sdf_kernel(pts_ref, lat_ref, wh_ref, out_ref):
    def seg(name):                            # static, zero-cost ref slice
        off, rows, cols = SEG[name]
        return wh_ref[off:off + rows, 0:cols]

    pts = pts_ref[...]                        # (3, T) f32, batch on lanes
    if FORCE_SYMMETRY:
        # abs on row 0 (x coordinate) only, via sublane-masked select
        row = jax.lax.broadcasted_iota(jnp.int32, pts.shape, 0)
        pts = jnp.where(row == 0, jnp.abs(pts), pts)
    lat = lat_ref[...]                        # (proj_latent, T) f32

    # Batched positional encoding: P[3f+j, :] = freq_f * pts[j, :] via one tiny
    # matmul, then a single full-lane-width sin and cos (EUP is the bottleneck).
    # (freqs are powers of two; any internal matmul rounding is << tolerance.)
    P = jnp.dot(seg("E"), pts, preferred_element_type=jnp.float32)   # (NF, T)
    sinP = jnp.sin(P)
    cosP = jnp.cos(P)

    def mm(name, x):                          # (out, K) @ (K, T) -> (out, T), f32
        return jnp.dot(seg(name), x, preferred_element_type=jnp.float32)

    def inputs_proj(l):
        # (emb ++ latent) projection, with the feature concat replaced by split
        # matmuls (each input stream hits its own weight columns).
        return (mm(f"L{l}_pts", pts) + mm(f"L{l}_sin", sinP)
                + mm(f"L{l}_cos", cosP) + mm(f"L{l}_lat", lat))

    x = None
    for l in range(NUM_LAYERS - 2):           # softplus layers
        acc = seg(f"L{l}_b")                  # (out, 1), broadcast over lanes
        if l == 0:
            acc = acc + inputs_proj(0)
        else:
            acc = acc + mm(f"L{l}_x", x)
            if l in SKIP_IN:
                # skip connection: the 1/sqrt(2) is folded into these weights
                acc = acc + inputs_proj(l)
        x = _softplus100(acc)                 # (N_CHANNEL, T), full-lane EUP/VPU

    # Final linear layer; lane dim = tile (multiple of 128) -> dense stores.
    out = mm("W3", x) + seg("b3")             # (1 + n_channel, T)
    out_ref[...] = out.astype(out_ref.dtype)


def sdf_forward(points, latent, slab, tile=1024):
    """points (N,3), latent (N,proj_latent), slab from pack_params() -> (N, 33)."""
    N = points.shape[0]
    tile = min(tile, N)
    assert N % tile == 0 and tile % 128 == 0, "N must be a multiple of tile (>=128)"
    out_dim = DIMS[-1]

    pts_t = points.T                          # (3, N)   batch on lanes
    lat_t = latent.T                          # (proj_latent, N)

    out_t = pl.pallas_call(
        sdf_kernel,
        out_shape=jax.ShapeDtypeStruct((out_dim, N), jnp.float32),
        grid=(N // tile,),
        in_specs=[
            pl.BlockSpec((3, tile), lambda i: (0, i)),
            pl.BlockSpec((PROJ_LATENT_DIM, tile), lambda i: (0, i)),
            pl.BlockSpec(slab.shape, lambda i: (0, 0)),   # packed weights/biases
        ],
        out_specs=pl.BlockSpec((out_dim, tile), lambda i: (0, i)),
        compiler_params=pltpu.CompilerParams(
            dimension_semantics=("parallel",)),
    )(pts_t, lat_t, slab)
    return out_t.T                            # (N, 1 + n_channel)


# ---------------- wrapper-side weight packing ----------------
def pack_params(params):
    """Pack the per-layer (W (in,out), b (out,)) params into one f32 slab:
       posenc expansion E, every hidden weight/bias (skip scale folded in) and
       the final W3/b3, each as an (out, in) segment at an 8-aligned row offset."""
    slab = np.zeros((SLAB_ROWS, SLAB_COLS), np.float32)

    def put(name, block):
        off, rows, cols = SEG[name]
        block = np.asarray(block, np.float32)
        assert block.shape == (rows, cols), (name, block.shape)
        slab[off:off + rows, 0:cols] = block

    # posenc expansion: P[3f+j, :] = freq_f * x_j  ->  E[3f+j, j] = freq_f
    E = np.zeros((NF, 3), np.float32)
    for f, fr in enumerate(FREQS):
        for j in range(3):
            E[3 * f + j, j] = fr
    put("E", E)

    def split_inputs_T(wT, scale):
        # wT: (out, DIMS[0]); input-col order [pts, sin f0, cos f0, ..., latent]
        wT = np.asarray(wT, np.float32) * scale
        w_pts = wT[:, 0:3]
        w_sin = np.concatenate([wT[:, 3 + 6 * f: 6 + 6 * f] for f in range(POSENC_RES)], 1)
        w_cos = np.concatenate([wT[:, 6 + 6 * f: 9 + 6 * f] for f in range(POSENC_RES)], 1)
        w_lat = wT[:, 3 + 2 * NF:]
        return w_pts, w_sin, w_cos, w_lat

    for l in range(NUM_LAYERS - 2):
        W, b = params[l]                       # W: (in, out), b: (out,)
        WT = np.asarray(W, np.float32).T       # (out, in)
        put(f"L{l}_b", np.asarray(b, np.float32).reshape(-1, 1))
        if l == 0:
            p, s, c, la = split_inputs_T(WT, 1.0)
            put("L0_pts", p); put("L0_sin", s); put("L0_cos", c); put("L0_lat", la)
        else:
            scale = INV_SQRT2 if l in SKIP_IN else 1.0
            put(f"L{l}_x", WT[:, :DIMS[l]] * scale)
            if l in SKIP_IN:
                p, s, c, la = split_inputs_T(WT[:, DIMS[l]:], scale)
                put(f"L{l}_pts", p); put(f"L{l}_sin", s); put(f"L{l}_cos", c)
                put(f"L{l}_lat", la)

    W3, b3 = params[NUM_LAYERS - 2]
    put("W3", np.asarray(W3, np.float32).T)                      # (33, 32)
    put("b3", np.asarray(b3, np.float32).reshape(-1, 1))         # (33, 1)
    return jnp.asarray(slab)


# ---------------- deterministic parameter init (geometric_init) ----------------
def init_params(key):
    params = []
    for l in range(NUM_LAYERS - 1):
        out_dim = DIMS[l + 1]
        in_dim = DIMS[l] + DIMS[0] if l in SKIP_IN else DIMS[l]
        key, wkey = jax.random.split(key)
        if GEOMETRIC_INIT and l == NUM_LAYERS - 2:
            w = (np.sqrt(np.pi) / np.sqrt(in_dim)
                 + 1e-4 * jax.random.normal(wkey, (out_dim, in_dim), jnp.float32))
            b = jnp.full((out_dim,), -INIT_SPHERE_RADIUS, jnp.float32)
        elif GEOMETRIC_INIT and POSENC_RES > 0 and l == 0:
            w = jnp.zeros((out_dim, in_dim), jnp.float32)
            w = w.at[:, :3].set(
                jax.random.normal(wkey, (out_dim, 3), jnp.float32)
                * (np.sqrt(2.0) / np.sqrt(out_dim)))
            b = jnp.zeros((out_dim,), jnp.float32)
        elif GEOMETRIC_INIT and POSENC_RES > 0 and l in SKIP_IN:
            w = (jax.random.normal(wkey, (out_dim, in_dim), jnp.float32)
                 * (np.sqrt(2.0) / np.sqrt(out_dim)))
            w = w.at[:, -(DIMS[0] - 3):].set(0.0)
            b = jnp.zeros((out_dim,), jnp.float32)
        else:
            w = (jax.random.normal(wkey, (out_dim, in_dim), jnp.float32)
                 * (np.sqrt(2.0) / np.sqrt(out_dim)))
            b = jnp.zeros((out_dim,), jnp.float32)
        # stored transposed: (in_dim, out_dim) so the reference does x @ w + b
        params.append((jnp.asarray(w, jnp.float32).T, jnp.asarray(b, jnp.float32)))
    return params


# ---------------- pure-JAX f32 reference for validation ----------------
def reference_forward(points, latent, params):
    pts = points
    if FORCE_SYMMETRY:
        pts = jnp.concatenate([jnp.abs(pts[:, :1]), pts[:, 1:]], axis=-1)
    feats = [pts]
    for f in FREQS:
        feats += [jnp.sin(pts * f), jnp.cos(pts * f)]
    inputs = jnp.concatenate(feats + [latent], axis=-1)
    x = inputs
    for l, (w, b) in enumerate(params):
        if l in SKIP_IN:
            x = jnp.concatenate([x, inputs], axis=-1) / np.sqrt(2.0)
        x = x @ w + b
        if l < NUM_LAYERS - 2:
            bx = 100.0 * x
            x = jnp.where(bx > 20.0, x, jnp.log1p(jnp.exp(bx)) / 100.0)
    return x


if __name__ == "__main__":
    key = jax.random.PRNGKey(0)
    kp, kl, kw = jax.random.split(key, 3)
    # tile=256 at N=2048 -> 8 grid steps -> >=2-3 steps per TensorCore on v7x.
    N = 2048
    points = jax.random.normal(kp, (N, 3), jnp.float32)
    latent = jax.random.normal(kl, (N, PROJ_LATENT_DIM), jnp.float32)
    params = init_params(kw)
    slab = pack_params(params)

    out = jax.block_until_ready(sdf_forward(points, latent, slab, tile=256))

    ref = reference_forward(points, latent, params)
    assert out.shape == (N, 1 + N_CHANNEL)
    # All kernel math is f32; tolerance covers default MXU matmul precision and
    # the (split vs fused) accumulation-order differences vs the XLA reference.
    np.testing.assert_allclose(np.asarray(out), np.asarray(ref),
                               atol=2e-2, rtol=2e-2)
    # TODO(synk): get_conditional_output's autograd gradient (d sdf / d points)
    # is not implemented here; only the forward pass is kernelized.
    print("KERNEL_OK")
</pallas_src>

<mosaic_0001>
module attributes {stable_mosaic.version = 11 : i64} {
  func.func @sdf_kernel(%arg0: i32, %arg1: memref<3x256xf32, #tpu.memory_space<vmem>>, %arg2: memref<16x256xf32, #tpu.memory_space<vmem>>, %arg3: memref<512x32xf32, #tpu.memory_space<vmem>>, %arg4: memref<33x256xf32, #tpu.memory_space<vmem>>) attributes {dimension_semantics = [#tpu.dimension_semantics<parallel>], iteration_bounds = array<i64: 8>, scalar_prefetch = 0 : i64, scratch_operands = 0 : i64, tpu.core_type = #tpu.core_type<tc>, window_params = [{transform_indices = @transform_0, window_bounds = array<i64: 3, 256>}, {transform_indices = @transform_1, window_bounds = array<i64: 16, 256>}, {pipeline_mode = #tpu.pipeline_mode<synchronous>, transform_indices = @transform_2, window_bounds = array<i64: 512, 32>}, {transform_indices = @transform_3, window_bounds = array<i64: 33, 256>}]} {
    %c0 = arith.constant 0 : index
    %c0_0 = arith.constant 0 : index
    %0 = vector.load %arg1[%c0, %c0_0] : memref<3x256xf32, #tpu.memory_space<vmem>>, vector<3x256xf32>
    %1 = tpu.iota {dimensions = array<i32: 0>} : vector<3x256xi32>
    %c0_i32 = arith.constant 0 : i32
    %2 = vector.broadcast %c0_i32 : i32 to vector<3x256xi32>
    %3 = arith.cmpi eq, %1, %2 : vector<3x256xi32>
    %4 = math.absf %0 : vector<3x256xf32>
    %5 = arith.select %3, %4, %0 : vector<3x256xi1>, vector<3x256xf32>
    %c0_1 = arith.constant 0 : index
    %c0_2 = arith.constant 0 : index
    %6 = vector.load %arg2[%c0_1, %c0_2] : memref<16x256xf32, #tpu.memory_space<vmem>>, vector<16x256xf32>
    %c0_3 = arith.constant 0 : index
    %c0_4 = arith.constant 0 : index
    %7 = vector.load %arg3[%c0_3, %c0_4] : memref<512x32xf32, #tpu.memory_space<vmem>>, vector<12x3xf32>
    %cst = arith.constant dense<0.000000e+00> : vector<12x256xf32>
    %8 = tpu.matmul %7, %5, %cst {dimension_numbers = #tpu.dot_dimension_numbers<[1], [0], [0], [1], [0, 0, 1, 1], [], []>} : vector<12x3xf32>, vector<3x256xf32>, vector<12x256xf32> -> vector<12x256xf32>
    %9 = math.sin %8 : vector<12x256xf32>
    %10 = math.cos %8 : vector<12x256xf32>
    %c144 = arith.constant 144 : index
    %c0_5 = arith.constant 0 : index
    %11 = vector.load %arg3[%c144, %c0_5] : memref<512x32xf32, #tpu.memory_space<vmem>>, vector<32x1xf32>
    %c16 = arith.constant 16 : index
    %c0_6 = arith.constant 0 : index
    %12 = vector.load %arg3[%c16, %c0_6] : memref<512x32xf32, #tpu.memory_space<vmem>>, vector<32x3xf32>
    %cst_7 = arith.constant dense<0.000000e+00> : vector<32x256xf32>
    %13 = tpu.matmul %12, %5, %cst_7 {dimension_numbers = #tpu.dot_dimension_numbers<[1], [0], [0], [1], [0, 0, 1, 1], [], []>} : vector<32x3xf32>, vector<3x256xf32>, vector<32x256xf32> -> vector<32x256xf32>
    %c48 = arith.constant 48 : index
    %c0_8 = arith.constant 0 : index
    %14 = vector.load %arg3[%c48, %c0_8] : memref<512x32xf32, #tpu.memory_space<vmem>>, vector<32x12xf32>
    %cst_9 = arith.constant dense<0.000000e+00> : vector<32x256xf32>
    %15 = tpu.matmul %14, %9, %cst_9 {dimension_numbers = #tpu.dot_dimension_numbers<[1], [0], [0], [1], [0, 0, 1, 1], [], []>} : vector<32x12xf32>, vector<12x256xf32>, vector<32x256xf32> -> vector<32x256xf32>
    %16 = arith.addf %13, %15 : vector<32x256xf32>
    %c80 = arith.constant 80 : index
    %c0_10 = arith.constant 0 : index
    %17 = vector.load %arg3[%c80, %c0_10] : memref<512x32xf32, #tpu.memory_space<vmem>>, vector<32x12xf32>
    %cst_11 = arith.constant dense<0.000000e+00> : vector<32x256xf32>
    %18 = tpu.matmul %17, %10, %cst_11 {dimension_numbers = #tpu.dot_dimension_numbers<[1], [0], [0], [1], [0, 0, 1, 1], [], []>} : vector<32x12xf32>, vector<12x256xf32>, vector<32x256xf32> -> vector<32x256xf32>
    %19 = arith.addf %16, %18 : vector<32x256xf32>
    %c112 = arith.constant 112 : index
    %c0_12 = arith.constant 0 : index
    %20 = vector.load %arg3[%c112, %c0_12] : memref<512x32xf32, #tpu.memory_space<vmem>>, vector<32x16xf32>
    %cst_13 = arith.constant dense<0.000000e+00> : vector<32x256xf32>
    %21 = tpu.matmul %20, %6, %cst_13 {dimension_numbers = #tpu.dot_dimension_numbers<[1], [0], [0], [1], [0, 0, 1, 1], [], []>} : vector<32x16xf32>, vector<16x256xf32>, vector<32x256xf32> -> vector<32x256xf32>
    %22 = arith.addf %19, %21 : vector<32x256xf32>
    %23 = vector.broadcast %11 : vector<32x1xf32> to vector<32x256xf32>
    %24 = arith.addf %23, %22 : vector<32x256xf32>
    %cst_14 = arith.constant 1.000000e+02 : f32
    %25 = vector.broadcast %cst_14 : f32 to vector<32x256xf32>
    %26 = arith.mulf %25, %24 : vector<32x256xf32>
    %cst_15 = arith.constant 2.000000e+01 : f32
    %27 = vector.broadcast %cst_15 : f32 to vector<32x256xf32>
    %28 = arith.cmpf ogt, %26, %27 : vector<32x256xf32>
    %29 = math.exp %26 : vector<32x256xf32>
    %30 = math.log1p %29 : vector<32x256xf32>
    %cst_16 = arith.constant 0.00999999977 : f32
    %31 = vector.broadcast %cst_16 : f32 to vector<32x256xf32>
    %32 = arith.mulf %30, %31 : vector<32x256xf32>
    %33 = arith.select %28, %24, %32 : vector<32x256xi1>, vector<32x256xf32>
    %c208 = arith.constant 208 : index
    %c0_17 = arith.constant 0 : index
    %34 = vector.load %arg3[%c208, %c0_17] : memref<512x32xf32, #tpu.memory_space<vmem>>, vector<32x1xf32>
    %c176 = arith.constant 176 : index
    %c0_18 = arith.constant 0 : index
    %35 = vector.load %arg3[%c176, %c0_18] : memref<512x32xf32, #tpu.memory_space<vmem>>, vector<32x32xf32>
    %cst_19 = arith.constant dense<0.000000e+00> : vector<32x256xf32>
    %36 = tpu.matmul %35, %33, %cst_19 {dimension_numbers = #tpu.dot_dimension_numbers<[1], [0], [0], [1], [0, 0, 1, 1], [], []>} : vector<32x32xf32>, vector<32x256xf32>, vector<32x256xf32> -> vector<32x256xf32>
    %37 = vector.broadcast %34 : vector<32x1xf32> to vector<32x256xf32>
    %38 = arith.addf %37, %36 : vector<32x256xf32>
    %cst_20 = arith.constant 1.000000e+02 : f32
    %39 = vector.broadcast %cst_20 : f32 to vector<32x256xf32>
    %40 = arith.mulf %39, %38 : vector<32x256xf32>
    %cst_21 = arith.constant 2.000000e+01 : f32
    %41 = vector.broadcast %cst_21 : f32 to vector<32x256xf32>
    %42 = arith.cmpf ogt, %40, %41 : vector<32x256xf32>
    %43 = math.exp %40 : vector<32x256xf32>
    %44 = math.log1p %43 : vector<32x256xf32>
    %cst_22 = arith.constant 0.00999999977 : f32
    %45 = vector.broadcast %cst_22 : f32 to vector<32x256xf32>
    %46 = arith.mulf %44, %45 : vector<32x256xf32>
    %47 = arith.select %42, %38, %46 : vector<32x256xi1>, vector<32x256xf32>
    %c400 = arith.constant 400 : index
    %c0_23 = arith.constant 0 : index
    %48 = vector.load %arg3[%c400, %c0_23] : memref<512x32xf32, #tpu.memory_space<vmem>>, vector<32x1xf32>
    %c240 = arith.constant 240 : index
    %c0_24 = arith.constant 0 : index
    %49 = vector.load %arg3[%c240, %c0_24] : memref<512x32xf32, #tpu.memory_space<vmem>>, vector<32x32xf32>
    %cst_25 = arith.constant dense<0.000000e+00> : vector<32x256xf32>
    %50 = tpu.matmul %49, %47, %cst_25 {dimension_numbers = #tpu.dot_dimension_numbers<[1], [0], [0], [1], [0, 0, 1, 1], [], []>} : vector<32x32xf32>, vector<32x256xf32>, vector<32x256xf32> -> vector<32x256xf32>
    %51 = vector.broadcast %48 : vector<32x1xf32> to vector<32x256xf32>
    %52 = arith.addf %51, %50 : vector<32x256xf32>
    %c272 = arith.constant 272 : index
    %c0_26 = arith.constant 0 : index
    %53 = vector.load %arg3[%c272, %c0_26] : memref<512x32xf32, #tpu.memory_space<vmem>>, vector<32x3xf32>
    %cst_27 = arith.constant dense<0.000000e+00> : vector<32x256xf32>
    %54 = tpu.matmul %53, %5, %cst_27 {dimension_numbers = #tpu.dot_dimension_numbers<[1], [0], [0], [1], [0, 0, 1, 1], [], []>} : vector<32x3xf32>, vector<3x256xf32>, vector<32x256xf32> -> vector<32x256xf32>
    %c304 = arith.constant 304 : index
    %c0_28 = arith.constant 0 : index
    %55 = vector.load %arg3[%c304, %c0_28] : memref<512x32xf32, #tpu.memory_space<vmem>>, vector<32x12xf32>
    %cst_29 = arith.constant dense<0.000000e+00> : vector<32x256xf32>
    %56 = tpu.matmul %55, %9, %cst_29 {dimension_numbers = #tpu.dot_dimension_numbers<[1], [0], [0], [1], [0, 0, 1, 1], [], []>} : vector<32x12xf32>, vector<12x256xf32>, vector<32x256xf32> -> vector<32x256xf32>
    %57 = arith.addf %54, %56 : vector<32x256xf32>
    %c336 = arith.constant 336 : index
    %c0_30 = arith.constant 0 : index
    %58 = vector.load %arg3[%c336, %c0_30] : memref<512x32xf32, #tpu.memory_space<vmem>>, vector<32x12xf32>
    %cst_31 = arith.constant dense<0.000000e+00> : vector<32x256xf32>
    %59 = tpu.matmul %58, %10, %cst_31 {dimension_numbers = #tpu.dot_dimension_numbers<[1], [0], [0], [1], [0, 0, 1, 1], [], []>} : vector<32x12xf32>, vector<12x256xf32>, vector<32x256xf32> -> vector<32x256xf32>
    %60 = arith.addf %57, %59 : vector<32x256xf32>
    %c368 = arith.constant 368 : index
    %c0_32 = arith.constant 0 : index
    %61 = vector.load %arg3[%c368, %c0_32] : memref<512x32xf32, #tpu.memory_space<vmem>>, vector<32x16xf32>
    %cst_33 = arith.constant dense<0.000000e+00> : vector<32x256xf32>
    %62 = tpu.matmul %61, %6, %cst_33 {dimension_numbers = #tpu.dot_dimension_numbers<[1], [0], [0], [1], [0, 0, 1, 1], [], []>} : vector<32x16xf32>, vector<16x256xf32>, vector<32x256xf32> -> vector<32x256xf32>
    %63 = arith.addf %60, %62 : vector<32x256xf32>
    %64 = arith.addf %52, %63 : vector<32x256xf32>
    %cst_34 = arith.constant 1.000000e+02 : f32
    %65 = vector.broadcast %cst_34 : f32 to vector<32x256xf32>
    %66 = arith.mulf %65, %64 : vector<32x256xf32>
    %cst_35 = arith.constant 2.000000e+01 : f32
    %67 = vector.broadcast %cst_35 : f32 to vector<32x256xf32>
    %68 = arith.cmpf ogt, %66, %67 : vector<32x256xf32>
    %69 = math.exp %66 : vector<32x256xf32>
    %70 = math.log1p %69 : vector<32x256xf32>
    %cst_36 = arith.constant 0.00999999977 : f32
    %71 = vector.broadcast %cst_36 : f32 to vector<32x256xf32>
    %72 = arith.mulf %70, %71 : vector<32x256xf32>
    %73 = arith.select %68, %64, %72 : vector<32x256xi1>, vector<32x256xf32>
    %c432 = arith.constant 432 : index
    %c0_37 = arith.constant 0 : index
    %74 = vector.load %arg3[%c432, %c0_37] : memref<512x32xf32, #tpu.memory_space<vmem>>, vector<33x32xf32>
    %cst_38 = arith.constant dense<0.000000e+00> : vector<33x256xf32>
    %75 = tpu.matmul %74, %73, %cst_38 {dimension_numbers = #tpu.dot_dimension_numbers<[1], [0], [0], [1], [0, 0, 1, 1], [], []>} : vector<33x32xf32>, vector<32x256xf32>, vector<33x256xf32> -> vector<33x256xf32>
    %c472 = arith.constant 472 : index
    %c0_39 = arith.constant 0 : index
    %76 = vector.load %arg3[%c472, %c0_39] : memref<512x32xf32, #tpu.memory_space<vmem>>, vector<33x1xf32>
    %77 = vector.broadcast %76 : vector<33x1xf32> to vector<33x256xf32>
    %78 = arith.addf %75, %77 : vector<33x256xf32>
    %c0_40 = arith.constant 0 : index
    %c0_41 = arith.constant 0 : index
    %79 = vector.load %arg4[%c0_40, %c0_41] : memref<33x256xf32, #tpu.memory_space<vmem>>, vector<33x256xf32>
    tpu.vector_store %arg4[%c0_40, %c0_41], %78 {strides = array<i32>} : memref<33x256xf32, #tpu.memory_space<vmem>>, vector<33x256xf32>,
    return
  }
  func.func @transform_0(%arg0: i32) -> (i32, i32) {
    %c0_i32 = arith.constant 0 : i32
    %c0_i32_0 = arith.constant 0 : i32
    return %c0_i32, %arg0 : i32, i32
  }
  func.func @transform_1(%arg0: i32) -> (i32, i32) {
    %c0_i32 = arith.constant 0 : i32
    %c0_i32_0 = arith.constant 0 : i32
    return %c0_i32, %arg0 : i32, i32
  }
  func.func @transform_2(%arg0: i32) -> (i32, i32) {
    %c0_i32 = arith.constant 0 : i32
    %c0_i32_0 = arith.constant 0 : i32
    %c0_i32_1 = arith.constant 0 : i32
    return %c0_i32, %c0_i32_0 : i32, i32
  }
  func.func @transform_3(%arg0: i32) -> (i32, i32) {
    %c0_i32 = arith.constant 0 : i32
    %c0_i32_0 = arith.constant 0 : i32
    return %c0_i32, %arg0 : i32, i32
  }
}

</mosaic_0001>

<llo_original>
// kernel: tpu_custom_call.1
$region0: #{tpu_custom_call.1}
  #allocation0 [shape = 'u32[]', space=smem, size = 0x4, offset = 0x4, fixed_abs, tag = 'smem constant byte address 0x4 - core index']
  #allocation1 [shape = 'u32[144,128]{1,0:T(1,128)}', space=vmem, size = 0x12000, scoped, tag = 'internal scratch']
  %s0 = inlined_call_operand.vmem [shape: f32[3,2048], index: 0, kind: input, shape index: {}]
  %s1 = inlined_call_operand.vmem [shape: f32[16,2048], index: 1, kind: input, shape index: {}]
  %s2 = inlined_call_operand.vmem [shape: f32[512,32], index: 2, kind: input, shape index: {}]
  %s3 = inlined_call_operand.hbm [shape: f32[33,2048], index: 3, kind: output, shape index: {}]
  %s4 = sld [smem:[#allocation0]]
  $region68: #{tpu_custom_call.1} parent=0
    _
  %s6 = ssub.s32 1, %s4
  %s7 = scalar_select 0, %s6, %s4
  $region1: #{tpu_custom_call.1} parent=0
    #allocation2 [shape = 'u8[32768]{0}', space=vmem, size = 0x8000, scoped, tag = 'input window, operand 1']
    #allocation3 [shape = 'u8[81920]{0}', space=vmem, size = 0x14000, scoped, tag = 'output window, operand 0']
    #allocation4 [shape = 's32[2]{0}', space=sflag, size = 0x8, scoped, tag = 'scoped memory for tpu_custom_call.1']
    %8 = vsyncpa [#allocation4], 0
    %s9 = scalar_lea.sflag [#allocation4], 1
    %10 = vsyncpa %s9, 0
    loop: start=0, step=1, limit=10
    $region2: #{tpu_custom_call.1} parent=1 // loop_pre_header
      _
    $region3: #{tpu_custom_call.1} parent=1 // loop_header
      %s12 = sphi 0, %s16
      %p13 = scmp.ge.s32.totalorder %s12, 10
      %s22 = sphi 0, %s24
      %s25 = sphi 0, %s22
      %s26 = sphi 0, %s25
      %s42 = sphi 0, %s26
      %s48 = sphi 0, %s50
      %s51 = sphi 0, %s48
      %s52 = sphi 0, %s51
      %s68 = sphi 0, %s52
      %s72 = sphi 0, %s72
      %s74 = sphi 0, %s72
      %s75 = sphi 0, %s74
      %s89 = sphi 0, %s75
      %s95 = sphi 0, %s97
      %s98 = sphi 0, %s95
      %s99 = sphi 0, %s98
      %s115 = sphi 0, %s99
    $region4: #{tpu_custom_call.1} parent=1 // loop_header_branch
      %15 = sbr.rel (%p13) target = $region8
    $region5: #{tpu_custom_call.1} parent=1 // loop_body
      %s17 = ssub.s32 %s12, 1
      %s18 = ssub.s32 %s12, 2
      %s19 = sadd.s32 %s12, 1
      %s20 = ssub.s32 %s12, %s19
      %p21 = scmp.eq.s32.totalorder %s20, 0
      %s23 = sadd.s32 %s22, 1
      %s24 = scalar_select %p21, %s22, %s23
      %p27 = pneg %p21
      %p28 = scmp.eq.s32.totalorder %s12, 7
      %p29 = por %p27, %p28
      %p30 = scmp.ne.s32.totalorder %s22, %s25
      %p31 = scmp.eq.s32.totalorder %s12, 0
      %p32 = por %p30, %p31
      %p33 = scmp.ne.s32.totalorder %s22, %s25
      %p34 = scmp.eq.s32.totalorder %s17, 7
      %p35 = por %p33, %p34
      %p36 = scmp.ne.s32.totalorder %s25, %s26
      %p37 = scmp.eq.s32.totalorder %s17, 0
      %p38 = por %p36, %p37
      %p39 = scmp.ne.s32.totalorder %s25, %s26
      %p40 = scmp.eq.s32.totalorder %s18, 7
      %p41 = por %p39, %p40
      %p43 = scmp.ne.s32.totalorder %s26, %s42
      %p44 = scmp.eq.s32.totalorder %s18, 0
      %p45 = por %p43, %p44
      %s46 = ssub.s32 %s12, %s19
      %p47 = scmp.eq.s32.totalorder %s46, 0
      %s49 = sadd.s32 %s48, 1
      %s50 = scalar_select %p47, %s48, %s49
      %p53 = pneg %p47
      %p54 = scmp.eq.s32.totalorder %s12, 7
      %p55 = por %p53, %p54
      %p56 = scmp.ne.s32.totalorder %s48, %s51
      %p57 = scmp.eq.s32.totalorder %s12, 0
      %p58 = por %p56, %p57
      %p59 = scmp.ne.s32.totalorder %s48, %s51
      %p60 = scmp.eq.s32.totalorder %s17, 7
      %p61 = por %p59, %p60
      %p62 = scmp.ne.s32.totalorder %s51, %s52
      %p63 = scmp.eq.s32.totalorder %s17, 0
      %p64 = por %p62, %p63
      %p65 = scmp.ne.s32.totalorder %s51, %s52
      %p66 = scmp.eq.s32.totalorder %s18, 7
      %p67 = por %p65, %p66
      %p69 = scmp.ne.s32.totalorder %s52, %s68
      %p70 = scmp.eq.s32.totalorder %s18, 0
      %p71 = por %p69, %p70
      %s73 = sadd.s32 %s72, 1
      %p76 = scmp.eq.s32.totalorder %s12, 7
      %p77 = scmp.ne.s32.totalorder %s72, %s74
      %p78 = scmp.eq.s32.totalorder %s12, 0
      %p79 = por %p77, %p78
      %p80 = scmp.ne.s32.totalorder %s72, %s74
      %p81 = scmp.eq.s32.totalorder %s17, 7
      %p82 = por %p80, %p81
      %p83 = scmp.ne.s32.totalorder %s74, %s75
      %p84 = scmp.eq.s32.totalorder %s17, 0
      %p85 = por %p83, %p84
      %p86 = scmp.ne.s32.totalorder %s74, %s75
      %p87 = scmp.eq.s32.totalorder %s18, 7
      %p88 = por %p86, %p87
      %p90 = scmp.ne.s32.totalorder %s75, %s89
      %p91 = scmp.eq.s32.totalorder %s18, 0
      %p92 = por %p90, %p91
      %s93 = ssub.s32 %s12, %s19
      %p94 = scmp.eq.s32.totalorder %s93, 0
      %s96 = sadd.s32 %s95, 1
      %s97 = scalar_select %p94, %s95, %s96
      %p100 = pneg %p94
      %p101 = scmp.eq.s32.totalorder %s12, 7
      %p102 = por %p100, %p101
      %p103 = scmp.ne.s32.totalorder %s95, %s98
      %p104 = scmp.eq.s32.totalorder %s12, 0
      %p105 = por %p103, %p104
      %p106 = scmp.ne.s32.totalorder %s95, %s98
      %p107 = scmp.eq.s32.totalorder %s17, 7
      %p108 = por %p106, %p107
      %p109 = scmp.ne.s32.totalorder %s98, %s99
      %p110 = scmp.eq.s32.totalorder %s17, 0
      %p111 = por %p109, %p110
      %p112 = scmp.ne.s32.totalorder %s98, %s99
      %p113 = scmp.eq.s32.totalorder %s18, 7
      %p114 = por %p112, %p113
      %p116 = scmp.ne.s32.totalorder %s99, %s115
      %p117 = scmp.eq.s32.totalorder %s18, 0
      %p118 = por %p116, %p117
      %p119 = scmp.le.s32.totalorder 1, %s12
      %p120 = scmp.lt.s32.totalorder %s12, 9
      %p121 = pnand %p119, %p120
      %p122 = pneg %p121
      // Predicated region
      $region9: #{tpu_custom_call.1} parent=5 // pred_check
        _
      $region10: #{tpu_custom_call.1} parent=5 // pred_check_branch
        %124 = sbr.rel (%p121) target = $region12
      $region11: #{tpu_custom_call.1} parent=5 // pred_region
        %s125 = ssub.s32 %s12, 1
        // Predicated region
        $region13: #{tpu_custom_call.1} parent=11 // pred_check
          %p126 = pneg %p85
        $region14: #{tpu_custom_call.1} parent=11 // pred_check_branch
          %128 = sbr.rel (%p126) target = $region16
        $region15: #{tpu_custom_call.1} parent=11 // pred_region
          _
        $region16: #{tpu_custom_call.1} parent=11 // pred_fallthru
          _
      $region12: #{tpu_custom_call.1} parent=5 // pred_fallthru
        _
      %p129 = scmp.lt.s32.totalorder %s12, 8
      // Predicated region
      $region17: #{tpu_custom_call.1} parent=5 // pred_check
        %p130 = pneg %p129
      $region18: #{tpu_custom_call.1} parent=5 // pred_check_branch
        %132 = sbr.rel (%p130) target = $region20
      $region19: #{tpu_custom_call.1} parent=5 // pred_region
        // Predicated region
        $region21: #{tpu_custom_call.1} parent=19 // pred_check
          %p133 = pneg %p32
        $region22: #{tpu_custom_call.1} parent=19 // pred_check_branch
          %135 = sbr.rel (%p133) target = $region24
        $region23: #{tpu_custom_call.1} parent=19 // pred_region
          %s136 = smul.u32 2, %s12
          %p137 = scmp.lt.s32.totalorder %s136, 15
          %s138 = scalar_select %p137, %s136, 15
          %s139 = smul.addr %s138, 4
          %s140 = scalar_lea.vmem %s0, %s139
          %s141 = smul.u32 2, %s12
        $region24: #{tpu_custom_call.1} parent=19 // pred_fallthru
          _
        // Predicated region
        $region25: #{tpu_custom_call.1} parent=19 // pred_check
          %p142 = pneg %p58
        $region26: #{tpu_custom_call.1} parent=19 // pred_check_branch
          %144 = sbr.rel (%p142) target = $region28
        $region27: #{tpu_custom_call.1} parent=19 // pred_region
          %s145 = sand.u32 %s48, 1
          %s146 = sand.u32 %s48, 1
          %s147 = smul.addr %s146, 32
          %s148 = scalar_lea.vmem [#allocation2], %s147
          %s149 = smul.u32 2, %s12
          %s150 = smul.addr %s149, 8
          %s151 = scalar_lea.vmem %s1, %s150
          // Predicated region
          $region29: #{tpu_custom_call.1} parent=27 // pred_check
            _
          $region30: #{tpu_custom_call.1} parent=27 // pred_check_branch
            %153 = sbr.rel (0) target = $region32
          $region31: #{tpu_custom_call.1} parent=27 // pred_region
            // Predicated region
            $region33: #{tpu_custom_call.1} parent=31 // pred_check
              _
            $region34: #{tpu_custom_call.1} parent=31 // pred_check_branch
              %155 = sbr.rel (0) target = $region36
            $region35: #{tpu_custom_call.1} parent=31 // pred_region
              loop: start=0, step=1, limit=1
              $region37: #{tpu_custom_call.1} parent=35 // loop_pre_header
                _
              $region38: #{tpu_custom_call.1} parent=35 // loop_header
                %s157 = sphi 0, %s161
                %p158 = scmp.ge.s32.totalorder %s157, 1
                %s162 = sphi %s151, %s151
                %s163 = sphi %s148, %s148
              $region39: #{tpu_custom_call.1} parent=35 // loop_header_branch
                %160 = sbr.rel (%p158) target = $region43
              $region40: #{tpu_custom_call.1} parent=35 // loop_body
                %v164 = vld [vmem:[%s162] sm:$0xff]
                %165 = vst [vmem:[%s163] sm:$0xff] %v164
                %v166 = vld [vmem:[%s162 + $0x8] sm:$0xff]
                %167 = vst [vmem:[%s163 + $0x8] sm:$0xff] %v166
                %v168 = vld [vmem:[%s162 + $0x80] sm:$0xff]
                %169 = vst [vmem:[%s163 + $0x10] sm:$0xff] %v168
                %v170 = vld [vmem:[%s162 + $0x88] sm:$0xff]
                %171 = vst [vmem:[%s163 + $0x18] sm:$0xff] %v170
              $region41: #{tpu_custom_call.1} parent=35 // loop_footer
                %s161 = sadd.s32 1, %s157
              $region42: #{tpu_custom_call.1} parent=35 // loop_footer_branch
                %156 = sbr.rel target = $region38
              $region43: #{tpu_custom_call.1} parent=35 // loop_exit
                _
            $region36: #{tpu_custom_call.1} parent=31 // pred_fallthru
              _
            // Predicated region
            $region44: #{tpu_custom_call.1} parent=31 // pred_check
              _
            $region45: #{tpu_custom_call.1} parent=31 // pred_check_branch
              %173 = sbr.rel target = $region47
            $region46: #{tpu_custom_call.1} parent=31 // pred_region
              _
            $region47: #{tpu_custom_call.1} parent=31 // pred_fallthru
              _
          $region32: #{tpu_custom_call.1} parent=27 // pred_fallthru
            _
          %174 = vnop
        $region28: #{tpu_custom_call.1} parent=19 // pred_fallthru
          _
      $region20: #{tpu_custom_call.1} parent=5 // pred_fallthru
        _
      %p175 = scmp.le.s32.totalorder 1, %s12
      %p176 = scmp.lt.s32.totalorder %s12, 9
      %p177 = pnand %p175, %p176
      %p178 = pneg %p177
      // Predicated region
      $region48: #{tpu_custom_call.1} parent=5 // pred_check
        _
      $region49: #{tpu_custom_call.1} parent=5 // pred_check_branch
        %180 = sbr.rel (%p177) target = $region51
      $region50: #{tpu_custom_call.1} parent=5 // pred_region
        %s181 = ssub.s32 %s12, 1
        %s182 = sand.u32 %s51, 1
        %s183 = sand.u32 %s51, 1
        %s184 = smul.addr %s183, 32
        %s185 = scalar_lea.vmem [#allocation2], %s184
        // Predicated region
        $region52: #{tpu_custom_call.1} parent=50 // pred_check
          %p186 = pneg %p64
        $region53: #{tpu_custom_call.1} parent=50 // pred_check_branch
          %188 = sbr.rel (%p186) target = $region55
        $region54: #{tpu_custom_call.1} parent=50 // pred_region
          _
        $region55: #{tpu_custom_call.1} parent=50 // pred_fallthru
          _
        %s189 = smul.u32 2, %s17
        %p190 = scmp.lt.s32.totalorder %s189, 15
        %s191 = scalar_select %p190, %s189, 15
        %s192 = smul.addr %s191, 4
        %s193 = scalar_lea.vmem %s0, %s192
        %p194 = pneg %p38
        %p195 = pneg %p35
        %s196 = sand.u32 %s51, 1
        %s197 = sand.u32 %s51, 1
        %s198 = smul.addr %s197, 32
        %s199 = scalar_lea.vmem [#allocation2], %s198
        %p200 = pneg %p64
        %p201 = pneg %p61
        %p202 = pneg %p85
        %p203 = pneg %p82
        %p204 = pneg %p111
        %p205 = pneg %p108
        %s206 = sand.u32 %s98, 1
        %s207 = scalar_lea.sflag [#allocation4], %s206
        %s208 = sand.u32 %s98, 1
        %s209 = smul.addr %s208, 80
        %s210 = scalar_lea.vmem [#allocation3], %s209
        %s211 = smul.u32 2, %s17
        %p212 = scmp.lt.s32.totalorder %s211, 15
        %s213 = scalar_select %p212, %s211, 15
        %s214 = smul.addr %s213, 4
        %s215 = scalar_lea.vmem %s0, %s214
        %s216 = smul.u32 2, %s17
        %s217 = smul.u32 2, %s17
        %s218 = smul.u32 2, %s17
        %v219 = vld [vmem:[%s215] sm:$0x77]
        %v220 = vlaneseq
        %v221 = vshrl.u32 %v220, 7
        %vm222 = vcmp.eq.s32.totalorder %v221, 0
        %v223 = vand.u32 2147483647, %v219
        %v225 = vcombine.high %v223, %v223
        %v228 = vcombine.high %v219, %v219
        %v230 = vsel %vm222, %v223, %v219
        %v231 = vsel %vm222, %v225, %v228
        %v232 = vld [vmem:[%s185] sm:$0xff]
        %v233 = vld [vmem:[%s185 + $0x8] sm:$0xff]
        %v234 = vld [vmem:[%s185 + $0x10] sm:$0xff]
        %v235 = vld [vmem:[%s185 + $0x18] sm:$0xff]
        %v236 = vld [vmem:[%s2] sm:$0xff]
        %v237 = vld [vmem:[%s2 + $0x8] sm:$0xf]
        %vm238 = vcmask 23552
        %v240 = vsel %vm238, %v236, 0
        %v243 = vsel %vm238, %v237, 0
        %vm245 = vcmask 1042432
        %v247 = vsel %vm245, %v230, 0
        %v250 = vsel %vm245, %v231, 0
        %252 = vmatprep.subr.mxu0 %v250
        %253 = vmatpush1.msra.mxu0 %v247
        %254 = vmatprep.subr.mxu0 0.0
        %255 = vmatpush1.msra.mxu0 0.0
        %256 = vmatprep.subr.mxu0 0.0
        %257 = vmatpush1.msra.mxu0 0.0
        %258 = vmatprep.subr.mxu0 0.0
        %259 = vmatpush1.msra.mxu0 0.0
        %260 = vmatprep.subr.mxu0 0.0
        %261 = vmatpush1.msra.mxu0 0.0
        %262 = vmatprep.subr.mxu0 0.0
        %263 = vmatpush1.msra.mxu0 0.0
        %264 = vmatprep.subr.mxu0 0.0
        %265 = vmatpush1.msra.mxu0 0.0
        %266 = vmatprep.subr.mxu0 0.0
        %267 = vmatpush1.msra.mxu0 0.0
        %268 = vmatprep.subr.mxu0 0.0
        %269 = vmatpush1.msra.mxu0 0.0
        %270 = vmatprep.subr.mxu0 0.0
        %271 = vmatpush1.msra.mxu0 0.0
        %272 = vmatprep.subr.mxu0 0.0
        %273 = vmatpush1.msra.mxu0 0.0
        %274 = vmatprep.subr.mxu0 0.0
        %275 = vmatpush1.msra.mxu0 0.0
        %276 = vmatprep.subr.mxu0 0.0
        %277 = vmatpush1.msra.mxu0 0.0
        %278 = vmatprep.subr.mxu0 0.0
        %279 = vmatpush1.msra.mxu0 0.0
        %280 = vmatprep.subr.mxu0 0.0
        %281 = vmatpush1.msra.mxu0 0.0
        %282 = vmatprep.subr.mxu0 0.0
        %283 = vmatpush1.msra.mxu0 0.0
        %284 = vmatprep.subr.mxu0 0.0
        %285 = vmatpush1.msra.mxu0 0.0
        %286 = vmatprep.subr.mxu0 0.0
        %287 = vmatpush1.msra.mxu0 0.0
        %288 = vmatprep.subr.mxu0 0.0
        %289 = vmatpush1.msra.mxu0 0.0
        %290 = vmatprep.subr.mxu0 0.0
        %291 = vmatpush1.msra.mxu0 0.0
        %292 = vmatprep.subr.mxu0 0.0
        %293 = vmatpush1.msra.mxu0 0.0
        %294 = vmatprep.subr.mxu0 0.0
        %295 = vmatpush1.msra.mxu0 0.0
        %296 = vmatprep.subr.mxu0 0.0
        %297 = vmatpush1.msra.mxu0 0.0
        %298 = vmatprep.subr.mxu0 0.0
        %299 = vmatpush1.msra.mxu0 0.0
        %300 = vmatprep.subr.mxu0 0.0
        %301 = vmatpush1.msra.mxu0 0.0
        %302 = vmatprep.subr.mxu0 0.0
        %303 = vmatpush1.msra.mxu0 0.0
        %304 = vmatprep.subr.mxu0 0.0
        %305 = vmatpush1.msra.mxu0 0.0
        %306 = vmatprep.subr.mxu0 0.0
        %307 = vmatpush1.msra.mxu0 0.0
        %308 = vmatprep.subr.mxu0 0.0
        %309 = vmatpush1.msra.mxu0 0.0
        %310 = vmatprep.subr.mxu0 0.0
        %311 = vmatpush1.msra.mxu0 0.0
        %312 = vmatprep.subr.mxu0 0.0
        %313 = vmatpush1.msra.mxu0 0.0
        %314 = vmatprep.subr.mxu0 0.0
        %315 = vmatpush1.msra.mxu0 0.0
        %316 = vmatprep.mubr.f32.mxu0 0.0
        %317 = vmatmul.mubr.f32.gmra.mrb[0].mxu0 %v240
        %v318 = vpop.f32.mrb[0].mxu0
        %v319 = vadd.f32 0.0, %v318
        %v320 = vpop.f32.mrb[0].mxu0
        %v321 = vadd.f32 0.0, %v320
        %322 = vmatprep.mubr.f32.mxu0 0.0
        %323 = vmatmul.mubr.f32.gmra.mrb[0].mxu0 %v243
        %v324 = vpop.f32.mrb[0].mxu0
        %v325 = vadd.f32 0.0, %v324
        %v326 = vpop.f32.mrb[0].mxu0
        %v327 = vadd.f32 0.0, %v326
        %328 = vdwg.mxu0
        %v329 = vand.u32 2147483647, %v319
        %vm330 = vcmp.le.f32.partialorder %v329, 0.7853982
        %vm331 = vcmp.lt.s32.totalorder %v319, 0
        %v332 = vand.u32 %v319, 2139095040
        %v333 = vshrl.u32 %v332, 23
        %v334 = vsub.s32 %v333, 127
        %v335 = vand.u32 2147483647, %v319
        %v336 = vand.u32 %v335, 8388607
        %v337 = vor.u32 %v336, 8388608
        %v338 = vsub.s32 0, %v337
        %v339 = vadd.s32 %v334, 1
        %vm340 = vcmp.gt.s32.totalorder %v339, 0
        %v341 = vsel %vm340, %v339, 0
        %v342 = vshrl.u32 %v341, 5
        %v343 = vand.u32 %v341, 31
        %v344 = vsub.s32 32, %v343
        %v345 = vshrl.u32 683565275, %v344
        %v346 = vshll.u32 683565275, %v343
        %v347 = vshrl.u32 2475754826, %v344
        %v348 = vor.u32 %v346, %v347
        %v349 = vshll.u32 2475754826, %v343
        %v350 = vshrl.u32 2131351028, %v344
        %v351 = vor.u32 %v349, %v350
        %v352 = vshll.u32 2131351028, %v343
        %v353 = vshrl.u32 2102212464, %v344
        %v354 = vor.u32 %v352, %v353
        %v355 = vshll.u32 2102212464, %v343
        %v356 = vshrl.u32 920167782, %v344
        %v357 = vor.u32 %v355, %v356
        %v358 = vshll.u32 920167782, %v343
        %v359 = vshrl.u32 1326507024, %v344
        %v360 = vor.u32 %v358, %v359
        %vm361 = vcmp.lt.s32.totalorder %v342, 1
        %vm362 = vcmp.lt.s32.totalorder %v342, 2
        %vm363 = vcmp.lt.s32.totalorder %v342, 3
        %vm364 = vcmp.lt.s32.totalorder %v342, 4
        %v365 = vsel %vm361, %v345, %v348
        %v366 = vsel %vm364, %v354, 2102212464
        %v367 = vsel %vm363, %v351, %v366
        %v368 = vsel %vm362, %v365, %v367
        %v369 = vsel %vm361, %v348, %v351
        %v370 = vsel %vm364, %v357, 920167782
        %v371 = vsel %vm363, %v354, %v370
        %v372 = vsel %vm362, %v369, %v371
        %v373 = vsel %vm361, %v351, %v354
        %v374 = vsel %vm364, %v360, 1326507024
        %v375 = vsel %vm363, %v357, %v374
        %v376 = vsel %vm362, %v373, %v375
        %v377 = vshll.u32 %v337, 8
        %v378 = vmul.u32.u64.compose %v377, %v376
        %v379 = vextract.low.u32 %v378
        %v380 = vextract.high.u32 %v378
        %v381 = vmul.u32.u64.compose %v377, %v372
        %v382 = vextract.low.u32 %v381
        %v383 = vextract.high.u32 %v381
        %v384 = vmul.u32 %v377, %v368
        %v385 = vadd.s32 %v380, %v382
        %vm386 = vc.u32 %v380, %v382
        %v387 = vadd.s32 %v383, 1
        %v388 = vsel %vm386, %v387, %v383
        %v389 = vadd.s32 %v384, %v388
        %v390 = vadd.s32 %v389, 536870912
        %v391 = vshrl.u32 %v390, 30
        %v392 = vshll.u32 %v391, 30
        %v393 = vsub.s32 %v389, %v392
        %vm394 = vcmp.lt.s32.totalorder %v393, 0
        %v395 = vsub.s32 0, %v393
        %v396 = vsel %vm394, %v395, %v393
        %v397 = vclz %v396
        %v398 = vsub.s32 %v397, 2
        %vm399 = vcmp.gt.s32.totalorder 0, %v398
        %v400 = vsel %vm399, 0, %v398
        %v401 = vsub.s32 32, %v400
        %v402 = vshll.u32 %v393, %v400
        %v403 = vshrl.u32 %v385, %v401
        %v404 = vor.u32 %v402, %v403
        %v405 = vsub.s32 4294967266, %v400
        %v406 = vadd.s32 %v405, 127
        %v407 = vshll.u32 %v406, 23
        %v408 = vor.u32 4788187, %v407
        %v409 = vand.u32 2147483647, %v408
        %v411 = vcvt.s32.f32 %v404
        %v412 = vmul.f32 %v411, %v409
        %v413 = vxor.u32 %v412, 2147483648
        %v414 = vsel %vm331, %v413, %v412
        %v415 = vsub.s32 4, %v391
        %v416 = vsel %vm331, %v415, %v391
        %v417 = vsel %vm330, %v319, %v414
        %v418 = vsel %vm330, 0, %v416
        %v419 = vcosq.f32.pop %v417
        %v420 = vsinq.f32.pop %v417
        %vm421 = vweird.f32 %v319
        %v422 = vadd.s32 %v418, 3
        %v423 = vand.u32 %v422, 3
        %vm424 = vcmp.lt.s32.totalorder %v423, 2
        %vm425 = vcmp.eq.s32.totalorder %v423, 0
        %v426 = vxor.u32 %v420, 2147483648
        %v427 = vsel %vm425, %v419, %v426
        %vm428 = vcmp.eq.s32.totalorder %v423, 2
        %v429 = vxor.u32 %v419, 2147483648
        %v430 = vsel %vm428, %v429, %v420
        %v431 = vsel %vm424, %v427, %v430
        %v432 = vsel %vm421, nan, %v431
        %v433 = vand.u32 2147483647, %v321
        %vm434 = vcmp.le.f32.partialorder %v433, 0.7853982
        %vm435 = vcmp.lt.s32.totalorder %v321, 0
        %v436 = vand.u32 %v321, 2139095040
        %v437 = vshrl.u32 %v436, 23
        %v438 = vsub.s32 %v437, 127
        %v439 = vand.u32 2147483647, %v321
        %v440 = vand.u32 %v439, 8388607
        %v441 = vor.u32 %v440, 8388608
        %v442 = vsub.s32 0, %v441
        %v443 = vadd.s32 %v438, 1
        %vm444 = vcmp.gt.s32.totalorder %v443, 0
        %v445 = vsel %vm444, %v443, 0
        %v446 = vshrl.u32 %v445, 5
        %v447 = vand.u32 %v445, 31
        %v448 = vsub.s32 32, %v447
        %v449 = vshrl.u32 683565275, %v448
        %v450 = vshll.u32 683565275, %v447
        %v451 = vshrl.u32 2475754826, %v448
        %v452 = vor.u32 %v450, %v451
        %v453 = vshll.u32 2475754826, %v447
        %v454 = vshrl.u32 2131351028, %v448
        %v455 = vor.u32 %v453, %v454
        %v456 = vshll.u32 2131351028, %v447
        %v457 = vshrl.u32 2102212464, %v448
        %v458 = vor.u32 %v456, %v457
        %v459 = vshll.u32 2102212464, %v447
        %v460 = vshrl.u32 920167782, %v448
        %v461 = vor.u32 %v459, %v460
        %v462 = vshll.u32 920167782, %v447
        %v463 = vshrl.u32 1326507024, %v448
        %v464 = vor.u32 %v462, %v463
        %vm465 = vcmp.lt.s32.totalorder %v446, 1
        %vm466 = vcmp.lt.s32.totalorder %v446, 2
        %vm467 = vcmp.lt.s32.totalorder %v446, 3
        %vm468 = vcmp.lt.s32.totalorder %v446, 4
        %v469 = vsel %vm465, %v449, %v452
        %v470 = vsel %vm468, %v458, 2102212464
        %v471 = vsel %vm467, %v455, %v470
        %v472 = vsel %vm466, %v469, %v471
        %v473 = vsel %vm465, %v452, %v455
        %v474 = vsel %vm468, %v461, 920167782
        %v475 = vsel %vm467, %v458, %v474
        %v476 = vsel %vm466, %v473, %v475
        %v477 = vsel %vm465, %v455, %v458
        %v478 = vsel %vm468, %v464, 1326507024
        %v479 = vsel %vm467, %v461, %v478
        %v480 = vsel %vm466, %v477, %v479
        %v481 = vshll.u32 %v441, 8
        %v482 = vmul.u32.u64.compose %v481, %v480
        %v483 = vextract.low.u32 %v482
        %v484 = vextract.high.u32 %v482
        %v485 = vmul.u32.u64.compose %v481, %v476
        %v486 = vextract.low.u32 %v485
        %v487 = vextract.high.u32 %v485
        %v488 = vmul.u32 %v481, %v472
        %v489 = vadd.s32 %v484, %v486
        %vm490 = vc.u32 %v484, %v486
        %v491 = vadd.s32 %v487, 1
        %v492 = vsel %vm490, %v491, %v487
        %v493 = vadd.s32 %v488, %v492
        %v494 = vadd.s32 %v493, 536870912
        %v495 = vshrl.u32 %v494, 30
        %v496 = vshll.u32 %v495, 30
        %v497 = vsub.s32 %v493, %v496
        %vm498 = vcmp.lt.s32.totalorder %v497, 0
        %v499 = vsub.s32 0, %v497
        %v500 = vsel %vm498, %v499, %v497
        %v501 = vclz %v500
        %v502 = vsub.s32 %v501, 2
        %vm503 = vcmp.gt.s32.totalorder 0, %v502
        %v504 = vsel %vm503, 0, %v502
        %v505 = vsub.s32 32, %v504
        %v506 = vshll.u32 %v497, %v504
        %v507 = vshrl.u32 %v489, %v505
        %v508 = vor.u32 %v506, %v507
        %v509 = vsub.s32 4294967266, %v504
        %v510 = vadd.s32 %v509, 127
        %v511 = vshll.u32 %v510, 23
        %v512 = vor.u32 4788187, %v511
        %v513 = vand.u32 2147483647, %v512
        %v515 = vcvt.s32.f32 %v508
        %v516 = vmul.f32 %v515, %v513
        %v517 = vxor.u32 %v516, 2147483648
        %v518 = vsel %vm435, %v517, %v516
        %v519 = vsub.s32 4, %v495
        %v520 = vsel %vm435, %v519, %v495
        %v521 = vsel %vm434, %v321, %v518
        %v522 = vsel %vm434, 0, %v520
        %v523 = vcosq.f32.pop %v521
        %v524 = vsinq.f32.pop %v521
        %vm525 = vweird.f32 %v321
        %v526 = vadd.s32 %v522, 3
        %v527 = vand.u32 %v526, 3
        %vm528 = vcmp.lt.s32.totalorder %v527, 2
        %vm529 = vcmp.eq.s32.totalorder %v527, 0
        %v530 = vxor.u32 %v524, 2147483648
        %v531 = vsel %vm529, %v523, %v530
        %vm532 = vcmp.eq.s32.totalorder %v527, 2
        %v533 = vxor.u32 %v523, 2147483648
        %v534 = vsel %vm532, %v533, %v524
        %v535 = vsel %vm528, %v531, %v534
        %v536 = vsel %vm525, nan, %v535
        %v537 = vand.u32 2147483647, %v325
        %vm538 = vcmp.le.f32.partialorder %v537, 0.7853982
        %vm539 = vcmp.lt.s32.totalorder %v325, 0
        %v540 = vand.u32 %v325, 2139095040
        %v541 = vshrl.u32 %v540, 23
        %v542 = vsub.s32 %v541, 127
        %v543 = vand.u32 2147483647, %v325
        %v544 = vand.u32 %v543, 8388607
        %v545 = vor.u32 %v544, 8388608
        %v546 = vsub.s32 0, %v545
        %v547 = vadd.s32 %v542, 1
        %vm548 = vcmp.gt.s32.totalorder %v547, 0
        %v549 = vsel %vm548, %v547, 0
        %v550 = vshrl.u32 %v549, 5
        %v551 = vand.u32 %v549, 31
        %v552 = vsub.s32 32, %v551
        %v553 = vshrl.u32 683565275, %v552
        %v554 = vshll.u32 683565275, %v551
        %v555 = vshrl.u32 2475754826, %v552
        %v556 = vor.u32 %v554, %v555
        %v557 = vshll.u32 2475754826, %v551
        %v558 = vshrl.u32 2131351028, %v552
        %v559 = vor.u32 %v557, %v558
        %v560 = vshll.u32 2131351028, %v551
        %v561 = vshrl.u32 2102212464, %v552
        %v562 = vor.u32 %v560, %v561
        %v563 = vshll.u32 2102212464, %v551
        %v564 = vshrl.u32 920167782, %v552
        %v565 = vor.u32 %v563, %v564
        %v566 = vshll.u32 920167782, %v551
        %v567 = vshrl.u32 1326507024, %v552
        %v568 = vor.u32 %v566, %v567
        %vm569 = vcmp.lt.s32.totalorder %v550, 1
        %vm570 = vcmp.lt.s32.totalorder %v550, 2
        %vm571 = vcmp.lt.s32.totalorder %v550, 3
        %vm572 = vcmp.lt.s32.totalorder %v550, 4
        %v573 = vsel %vm569, %v553, %v556
        %v574 = vsel %vm572, %v562, 2102212464
        %v575 = vsel %vm571, %v559, %v574
        %v576 = vsel %vm570, %v573, %v575
        %v577 = vsel %vm569, %v556, %v559
        %v578 = vsel %vm572, %v565, 920167782
        %v579 = vsel %vm571, %v562, %v578
        %v580 = vsel %vm570, %v577, %v579
        %v581 = vsel %vm569, %v559, %v562
        %v582 = vsel %vm572, %v568, 1326507024
        %v583 = vsel %vm571, %v565, %v582
        %v584 = vsel %vm570, %v581, %v583
        %v585 = vshll.u32 %v545, 8
        %v586 = vmul.u32.u64.compose %v585, %v584
        %v587 = vextract.low.u32 %v586
        %v588 = vextract.high.u32 %v586
        %v589 = vmul.u32.u64.compose %v585, %v580
        %v590 = vextract.low.u32 %v589
        %v591 = vextract.high.u32 %v589
        %v592 = vmul.u32 %v585, %v576
        %v593 = vadd.s32 %v588, %v590
        %vm594 = vc.u32 %v588, %v590
        %v595 = vadd.s32 %v591, 1
        %v596 = vsel %vm594, %v595, %v591
        %v597 = vadd.s32 %v592, %v596
        %v598 = vadd.s32 %v597, 536870912
        %v599 = vshrl.u32 %v598, 30
        %v600 = vshll.u32 %v599, 30
        %v601 = vsub.s32 %v597, %v600
        %vm602 = vcmp.lt.s32.totalorder %v601, 0
        %v603 = vsub.s32 0, %v601
        %v604 = vsel %vm602, %v603, %v601
        %v605 = vclz %v604
        %v606 = vsub.s32 %v605, 2
        %vm607 = vcmp.gt.s32.totalorder 0, %v606
        %v608 = vsel %vm607, 0, %v606
        %v609 = vsub.s32 32, %v608
        %v610 = vshll.u32 %v601, %v608
        %v611 = vshrl.u32 %v593, %v609
        %v612 = vor.u32 %v610, %v611
        %v613 = vsub.s32 4294967266, %v608
        %v614 = vadd.s32 %v613, 127
        %v615 = vshll.u32 %v614, 23
        %v616 = vor.u32 4788187, %v615
        %v617 = vand.u32 2147483647, %v616
        %v619 = vcvt.s32.f32 %v612
        %v620 = vmul.f32 %v619, %v617
        %v621 = vxor.u32 %v620, 2147483648
        %v622 = vsel %vm539, %v621, %v620
        %v623 = vsub.s32 4, %v599
        %v624 = vsel %vm539, %v623, %v599
        %v625 = vsel %vm538, %v325, %v622
        %v626 = vsel %vm538, 0, %v624
        %v627 = vcosq.f32.pop %v625
        %v628 = vsinq.f32.pop %v625
        %vm629 = vweird.f32 %v325
        %v630 = vadd.s32 %v626, 3
        %v631 = vand.u32 %v630, 3
        %vm632 = vcmp.lt.s32.totalorder %v631, 2
        %vm633 = vcmp.eq.s32.totalorder %v631, 0
        %v634 = vxor.u32 %v628, 2147483648
        %v635 = vsel %vm633, %v627, %v634
        %vm636 = vcmp.eq.s32.totalorder %v631, 2
        %v637 = vxor.u32 %v627, 2147483648
        %v638 = vsel %vm636, %v637, %v628
        %v639 = vsel %vm632, %v635, %v638
        %v640 = vsel %vm629, nan, %v639
        %v641 = vand.u32 2147483647, %v327
        %vm642 = vcmp.le.f32.partialorder %v641, 0.7853982
        %vm643 = vcmp.lt.s32.totalorder %v327, 0
        %v644 = vand.u32 %v327, 2139095040
        %v645 = vshrl.u32 %v644, 23
        %v646 = vsub.s32 %v645, 127
        %v647 = vand.u32 2147483647, %v327
        %v648 = vand.u32 %v647, 8388607
        %v649 = vor.u32 %v648, 8388608
        %v650 = vsub.s32 0, %v649
        %v651 = vadd.s32 %v646, 1
        %vm652 = vcmp.gt.s32.totalorder %v651, 0
        %v653 = vsel %vm652, %v651, 0
        %v654 = vshrl.u32 %v653, 5
        %v655 = vand.u32 %v653, 31
        %v656 = vsub.s32 32, %v655
        %v657 = vshrl.u32 683565275, %v656
        %v658 = vshll.u32 683565275, %v655
        %v659 = vshrl.u32 2475754826, %v656
        %v660 = vor.u32 %v658, %v659
        %v661 = vshll.u32 2475754826, %v655
        %v662 = vshrl.u32 2131351028, %v656
        %v663 = vor.u32 %v661, %v662
        %v664 = vshll.u32 2131351028, %v655
        %v665 = vshrl.u32 2102212464, %v656
        %v666 = vor.u32 %v664, %v665
        %v667 = vshll.u32 2102212464, %v655
        %v668 = vshrl.u32 920167782, %v656
        %v669 = vor.u32 %v667, %v668
        %v670 = vshll.u32 920167782, %v655
        %v671 = vshrl.u32 1326507024, %v656
        %v672 = vor.u32 %v670, %v671
        %vm673 = vcmp.lt.s32.totalorder %v654, 1
        %vm674 = vcmp.lt.s32.totalorder %v654, 2
        %vm675 = vcmp.lt.s32.totalorder %v654, 3
        %vm676 = vcmp.lt.s32.totalorder %v654, 4
        %v677 = vsel %vm673, %v657, %v660
        %v678 = vsel %vm676, %v666, 2102212464
        %v679 = vsel %vm675, %v663, %v678
        %v680 = vsel %vm674, %v677, %v679
        %v681 = vsel %vm673, %v660, %v663
        %v682 = vsel %vm676, %v669, 920167782
        %v683 = vsel %vm675, %v666, %v682
        %v684 = vsel %vm674, %v681, %v683
        %v685 = vsel %vm673, %v663, %v666
        %v686 = vsel %vm676, %v672, 1326507024
        %v687 = vsel %vm675, %v669, %v686
        %v688 = vsel %vm674, %v685, %v687
        %v689 = vshll.u32 %v649, 8
        %v690 = vmul.u32.u64.compose %v689, %v688
        %v691 = vextract.low.u32 %v690
        %v692 = vextract.high.u32 %v690
        %v693 = vmul.u32.u64.compose %v689, %v684
        %v694 = vextract.low.u32 %v693
        %v695 = vextract.high.u32 %v693
        %v696 = vmul.u32 %v689, %v680
        %v697 = vadd.s32 %v692, %v694
        %vm698 = vc.u32 %v692, %v694
        %v699 = vadd.s32 %v695, 1
        %v700 = vsel %vm698, %v699, %v695
        %v701 = vadd.s32 %v696, %v700
        %v702 = vadd.s32 %v701, 536870912
        %v703 = vshrl.u32 %v702, 30
        %v704 = vshll.u32 %v703, 30
        %v705 = vsub.s32 %v701, %v704
        %vm706 = vcmp.lt.s32.totalorder %v705, 0
        %v707 = vsub.s32 0, %v705
        %v708 = vsel %vm706, %v707, %v705
        %v709 = vclz %v708
        %v710 = vsub.s32 %v709, 2
        %vm711 = vcmp.gt.s32.totalorder 0, %v710
        %v712 = vsel %vm711, 0, %v710
        %v713 = vsub.s32 32, %v712
        %v714 = vshll.u32 %v705, %v712
        %v715 = vshrl.u32 %v697, %v713
        %v716 = vor.u32 %v714, %v715
        %v717 = vsub.s32 4294967266, %v712
        %v718 = vadd.s32 %v717, 127
        %v719 = vshll.u32 %v718, 23
        %v720 = vor.u32 4788187, %v719
        %v721 = vand.u32 2147483647, %v720
        %v723 = vcvt.s32.f32 %v716
        %v724 = vmul.f32 %v723, %v721
        %v725 = vxor.u32 %v724, 2147483648
        %v726 = vsel %vm643, %v725, %v724
        %v727 = vsub.s32 4, %v703
        %v728 = vsel %vm643, %v727, %v703
        %v729 = vsel %vm642, %v327, %v726
        %v730 = vsel %vm642, 0, %v728
        %v731 = vcosq.f32.pop %v729
        %v732 = vsinq.f32.pop %v729
        %vm733 = vweird.f32 %v327
        %v734 = vadd.s32 %v730, 3
        %v735 = vand.u32 %v734, 3
        %vm736 = vcmp.lt.s32.totalorder %v735, 2
        %vm737 = vcmp.eq.s32.totalorder %v735, 0
        %v738 = vxor.u32 %v732, 2147483648
        %v739 = vsel %vm737, %v731, %v738
        %vm740 = vcmp.eq.s32.totalorder %v735, 2
        %v741 = vxor.u32 %v731, 2147483648
        %v742 = vsel %vm740, %v741, %v732
        %v743 = vsel %vm736, %v739, %v742
        %v744 = vsel %vm733, nan, %v743
        %v745 = vand.u32 2147483647, %v319
        %vm746 = vcmp.le.f32.partialorder %v745, 0.7853982
        %vm747 = vcmp.lt.s32.totalorder %v319, 0
        %v748 = vand.u32 %v319, 2139095040
        %v749 = vshrl.u32 %v748, 23
        %v750 = vsub.s32 %v749, 127
        %v751 = vand.u32 2147483647, %v319
        %v752 = vand.u32 %v751, 8388607
        %v753 = vor.u32 %v752, 8388608
        %v754 = vsub.s32 0, %v753
        %v755 = vadd.s32 %v750, 1
        %vm756 = vcmp.gt.s32.totalorder %v755, 0
        %v757 = vsel %vm756, %v755, 0
        %v758 = vshrl.u32 %v757, 5
        %v759 = vand.u32 %v757, 31
        %v760 = vsub.s32 32, %v759
        %v761 = vshrl.u32 683565275, %v760
        %v762 = vshll.u32 683565275, %v759
        %v763 = vshrl.u32 2475754826, %v760
        %v764 = vor.u32 %v762, %v763
        %v765 = vshll.u32 2475754826, %v759
        %v766 = vshrl.u32 2131351028, %v760
        %v767 = vor.u32 %v765, %v766
        %v768 = vshll.u32 2131351028, %v759
        %v769 = vshrl.u32 2102212464, %v760
        %v770 = vor.u32 %v768, %v769
        %v771 = vshll.u32 2102212464, %v759
        %v772 = vshrl.u32 920167782, %v760
        %v773 = vor.u32 %v771, %v772
        %v774 = vshll.u32 920167782, %v759
        %v775 = vshrl.u32 1326507024, %v760
        %v776 = vor.u32 %v774, %v775
        %vm777 = vcmp.lt.s32.totalorder %v758, 1
        %vm778 = vcmp.lt.s32.totalorder %v758, 2
        %vm779 = vcmp.lt.s32.totalorder %v758, 3
        %vm780 = vcmp.lt.s32.totalorder %v758, 4
        %v781 = vsel %vm777, %v761, %v764
        %v782 = vsel %vm780, %v770, 2102212464
        %v783 = vsel %vm779, %v767, %v782
        %v784 = vsel %vm778, %v781, %v783
        %v785 = vsel %vm777, %v764, %v767
        %v786 = vsel %vm780, %v773, 920167782
        %v787 = vsel %vm779, %v770, %v786
        %v788 = vsel %vm778, %v785, %v787
        %v789 = vsel %vm777, %v767, %v770
        %v790 = vsel %vm780, %v776, 1326507024
        %v791 = vsel %vm779, %v773, %v790
        %v792 = vsel %vm778, %v789, %v791
        %v793 = vshll.u32 %v753, 8
        %v794 = vmul.u32.u64.compose %v793, %v792
        %v795 = vextract.low.u32 %v794
        %v796 = vextract.high.u32 %v794
        %v797 = vmul.u32.u64.compose %v793, %v788
        %v798 = vextract.low.u32 %v797
        %v799 = vextract.high.u32 %v797
        %v800 = vmul.u32 %v793, %v784
        %v801 = vadd.s32 %v796, %v798
        %vm802 = vc.u32 %v796, %v798
        %v803 = vadd.s32 %v799, 1
        %v804 = vsel %vm802, %v803, %v799
        %v805 = vadd.s32 %v800, %v804
        %v806 = vadd.s32 %v805, 536870912
        %v807 = vshrl.u32 %v806, 30
        %v808 = vshll.u32 %v807, 30
        %v809 = vsub.s32 %v805, %v808
        %vm810 = vcmp.lt.s32.totalorder %v809, 0
        %v811 = vsub.s32 0, %v809
        %v812 = vsel %vm810, %v811, %v809
        %v813 = vclz %v812
        %v814 = vsub.s32 %v813, 2
        %vm815 = vcmp.gt.s32.totalorder 0, %v814
        %v816 = vsel %vm815, 0, %v814
        %v817 = vsub.s32 32, %v816
        %v818 = vshll.u32 %v809, %v816
        %v819 = vshrl.u32 %v801, %v817
        %v820 = vor.u32 %v818, %v819
        %v821 = vsub.s32 4294967266, %v816
        %v822 = vadd.s32 %v821, 127
        %v823 = vshll.u32 %v822, 23
        %v824 = vor.u32 4788187, %v823
        %v825 = vand.u32 2147483647, %v824
        %v827 = vcvt.s32.f32 %v820
        %v828 = vmul.f32 %v827, %v825
        %v829 = vxor.u32 %v828, 2147483648
        %v830 = vsel %vm747, %v829, %v828
        %v831 = vsub.s32 4, %v807
        %v832 = vsel %vm747, %v831, %v807
        %v833 = vsel %vm746, %v319, %v830
        %v834 = vsel %vm746, 0, %v832
        %v835 = vcosq.f32.pop %v833
        %v836 = vsinq.f32.pop %v833
        %vm837 = vweird.f32 %v319
        %v838 = vand.u32 %v834, 3
        %vm839 = vcmp.lt.s32.totalorder %v838, 2
        %vm840 = vcmp.eq.s32.totalorder %v838, 0
        %v841 = vxor.u32 %v836, 2147483648
        %v842 = vsel %vm840, %v835, %v841
        %vm843 = vcmp.eq.s32.totalorder %v838, 2
        %v844 = vxor.u32 %v835, 2147483648
        %v845 = vsel %vm843, %v844, %v836
        %v846 = vsel %vm839, %v842, %v845
        %v847 = vsel %vm837, nan, %v846
        %v848 = vand.u32 2147483647, %v321
        %vm849 = vcmp.le.f32.partialorder %v848, 0.7853982
        %vm850 = vcmp.lt.s32.totalorder %v321, 0
        %v851 = vand.u32 %v321, 2139095040
        %v852 = vshrl.u32 %v851, 23
        %v853 = vsub.s32 %v852, 127
        %v854 = vand.u32 2147483647, %v321
        %v855 = vand.u32 %v854, 8388607
        %v856 = vor.u32 %v855, 8388608
        %v857 = vsub.s32 0, %v856
        %v858 = vadd.s32 %v853, 1
        %vm859 = vcmp.gt.s32.totalorder %v858, 0
        %v860 = vsel %vm859, %v858, 0
        %v861 = vshrl.u32 %v860, 5
        %v862 = vand.u32 %v860, 31
        %v863 = vsub.s32 32, %v862
        %v864 = vshrl.u32 683565275, %v863
        %v865 = vshll.u32 683565275, %v862
        %v866 = vshrl.u32 2475754826, %v863
        %v867 = vor.u32 %v865, %v866
        %v868 = vshll.u32 2475754826, %v862
        %v869 = vshrl.u32 2131351028, %v863
        %v870 = vor.u32 %v868, %v869
        %v871 = vshll.u32 2131351028, %v862
        %v872 = vshrl.u32 2102212464, %v863
        %v873 = vor.u32 %v871, %v872
        %v874 = vshll.u32 2102212464, %v862
        %v875 = vshrl.u32 920167782, %v863
        %v876 = vor.u32 %v874, %v875
        %v877 = vshll.u32 920167782, %v862
        %v878 = vshrl.u32 1326507024, %v863
        %v879 = vor.u32 %v877, %v878
        %vm880 = vcmp.lt.s32.totalorder %v861, 1
        %vm881 = vcmp.lt.s32.totalorder %v861, 2
        %vm882 = vcmp.lt.s32.totalorder %v861, 3
        %vm883 = vcmp.lt.s32.totalorder %v861, 4
        %v884 = vsel %vm880, %v864, %v867
        %v885 = vsel %vm883, %v873, 2102212464
        %v886 = vsel %vm882, %v870, %v885
        %v887 = vsel %vm881, %v884, %v886
        %v888 = vsel %vm880, %v867, %v870
        %v889 = vsel %vm883, %v876, 920167782
        %v890 = vsel %vm882, %v873, %v889
        %v891 = vsel %vm881, %v888, %v890
        %v892 = vsel %vm880, %v870, %v873
        %v893 = vsel %vm883, %v879, 1326507024
        %v894 = vsel %vm882, %v876, %v893
        %v895 = vsel %vm881, %v892, %v894
        %v896 = vshll.u32 %v856, 8
        %v897 = vmul.u32.u64.compose %v896, %v895
        %v898 = vextract.low.u32 %v897
        %v899 = vextract.high.u32 %v897
        %v900 = vmul.u32.u64.compose %v896, %v891
        %v901 = vextract.low.u32 %v900
        %v902 = vextract.high.u32 %v900
        %v903 = vmul.u32 %v896, %v887
        %v904 = vadd.s32 %v899, %v901
        %vm905 = vc.u32 %v899, %v901
        %v906 = vadd.s32 %v902, 1
        %v907 = vsel %vm905, %v906, %v902
        %v908 = vadd.s32 %v903, %v907
        %v909 = vadd.s32 %v908, 536870912
        %v910 = vshrl.u32 %v909, 30
        %v911 = vshll.u32 %v910, 30
        %v912 = vsub.s32 %v908, %v911
        %vm913 = vcmp.lt.s32.totalorder %v912, 0
        %v914 = vsub.s32 0, %v912
        %v915 = vsel %vm913, %v914, %v912
        %v916 = vclz %v915
        %v917 = vsub.s32 %v916, 2
        %vm918 = vcmp.gt.s32.totalorder 0, %v917
        %v919 = vsel %vm918, 0, %v917
        %v920 = vsub.s32 32, %v919
        %v921 = vshll.u32 %v912, %v919
        %v922 = vshrl.u32 %v904, %v920
        %v923 = vor.u32 %v921, %v922
        %v924 = vsub.s32 4294967266, %v919
        %v925 = vadd.s32 %v924, 127
        %v926 = vshll.u32 %v925, 23
        %v927 = vor.u32 4788187, %v926
        %v928 = vand.u32 2147483647, %v927
        %v930 = vcvt.s32.f32 %v923
        %v931 = vmul.f32 %v930, %v928
        %v932 = vxor.u32 %v931, 2147483648
        %v933 = vsel %vm850, %v932, %v931
        %v934 = vsub.s32 4, %v910
        %v935 = vsel %vm850, %v934, %v910
        %v936 = vsel %vm849, %v321, %v933
        %v937 = vsel %vm849, 0, %v935
        %v938 = vcosq.f32.pop %v936
        %v939 = vsinq.f32.pop %v936
        %vm940 = vweird.f32 %v321
        %v941 = vand.u32 %v937, 3
        %vm942 = vcmp.lt.s32.totalorder %v941, 2
        %vm943 = vcmp.eq.s32.totalorder %v941, 0
        %v944 = vxor.u32 %v939, 2147483648
        %v945 = vsel %vm943, %v938, %v944
        %vm946 = vcmp.eq.s32.totalorder %v941, 2
        %v947 = vxor.u32 %v938, 2147483648
        %v948 = vsel %vm946, %v947, %v939
        %v949 = vsel %vm942, %v945, %v948
        %v950 = vsel %vm940, nan, %v949
        %v951 = vand.u32 2147483647, %v325
        %vm952 = vcmp.le.f32.partialorder %v951, 0.7853982
        %vm953 = vcmp.lt.s32.totalorder %v325, 0
        %v954 = vand.u32 %v325, 2139095040
        %v955 = vshrl.u32 %v954, 23
        %v956 = vsub.s32 %v955, 127
        %v957 = vand.u32 2147483647, %v325
        %v958 = vand.u32 %v957, 8388607
        %v959 = vor.u32 %v958, 8388608
        %v960 = vsub.s32 0, %v959
        %v961 = vadd.s32 %v956, 1
        %vm962 = vcmp.gt.s32.totalorder %v961, 0
        %v963 = vsel %vm962, %v961, 0
        %v964 = vshrl.u32 %v963, 5
        %v965 = vand.u32 %v963, 31
        %v966 = vsub.s32 32, %v965
        %v967 = vshrl.u32 683565275, %v966
        %v968 = vshll.u32 683565275, %v965
        %v969 = vshrl.u32 2475754826, %v966
        %v970 = vor.u32 %v968, %v969
        %v971 = vshll.u32 2475754826, %v965
        %v972 = vshrl.u32 2131351028, %v966
        %v973 = vor.u32 %v971, %v972
        %v974 = vshll.u32 2131351028, %v965
        %v975 = vshrl.u32 2102212464, %v966
        %v976 = vor.u32 %v974, %v975
        %v977 = vshll.u32 2102212464, %v965
        %v978 = vshrl.u32 920167782, %v966
        %v979 = vor.u32 %v977, %v978
        %v980 = vshll.u32 920167782, %v965
        %v981 = vshrl.u32 1326507024, %v966
        %v982 = vor.u32 %v980, %v981
        %vm983 = vcmp.lt.s32.totalorder %v964, 1
        %vm984 = vcmp.lt.s32.totalorder %v964, 2
        %vm985 = vcmp.lt.s32.totalorder %v964, 3
        %vm986 = vcmp.lt.s32.totalorder %v964, 4
        %v987 = vsel %vm983, %v967, %v970
        %v988 = vsel %vm986, %v976, 2102212464
        %v989 = vsel %vm985, %v973, %v988
        %v990 = vsel %vm984, %v987, %v989
        %v991 = vsel %vm983, %v970, %v973
        %v992 = vsel %vm986, %v979, 920167782
        %v993 = vsel %vm985, %v976, %v992
        %v994 = vsel %vm984, %v991, %v993
        %v995 = vsel %vm983, %v973, %v976
        %v996 = vsel %vm986, %v982, 1326507024
        %v997 = vsel %vm985, %v979, %v996
        %v998 = vsel %vm984, %v995, %v997
        %v999 = vshll.u32 %v959, 8
        %v1000 = vmul.u32.u64.compose %v999, %v998
        %v1001 = vextract.low.u32 %v1000
        %v1002 = vextract.high.u32 %v1000
        %v1003 = vmul.u32.u64.compose %v999, %v994
        %v1004 = vextract.low.u32 %v1003
        %v1005 = vextract.high.u32 %v1003
        %v1006 = vmul.u32 %v999, %v990
        %v1007 = vadd.s32 %v1002, %v1004
        %vm1008 = vc.u32 %v1002, %v1004
        %v1009 = vadd.s32 %v1005, 1
        %v1010 = vsel %vm1008, %v1009, %v1005
        %v1011 = vadd.s32 %v1006, %v1010
        %v1012 = vadd.s32 %v1011, 536870912
        %v1013 = vshrl.u32 %v1012, 30
        %v1014 = vshll.u32 %v1013, 30
        %v1015 = vsub.s32 %v1011, %v1014
        %vm1016 = vcmp.lt.s32.totalorder %v1015, 0
        %v1017 = vsub.s32 0, %v1015
        %v1018 = vsel %vm1016, %v1017, %v1015
        %v1019 = vclz %v1018
        %v1020 = vsub.s32 %v1019, 2
        %vm1021 = vcmp.gt.s32.totalorder 0, %v1020
        %v1022 = vsel %vm1021, 0, %v1020
        %v1023 = vsub.s32 32, %v1022
        %v1024 = vshll.u32 %v1015, %v1022
        %v1025 = vshrl.u32 %v1007, %v1023
        %v1026 = vor.u32 %v1024, %v1025
        %v1027 = vsub.s32 4294967266, %v1022
        %v1028 = vadd.s32 %v1027, 127
        %v1029 = vshll.u32 %v1028, 23
        %v1030 = vor.u32 4788187, %v1029
        %v1031 = vand.u32 2147483647, %v1030
        %v1033 = vcvt.s32.f32 %v1026
        %v1034 = vmul.f32 %v1033, %v1031
        %v1035 = vxor.u32 %v1034, 2147483648
        %v1036 = vsel %vm953, %v1035, %v1034
        %v1037 = vsub.s32 4, %v1013
        %v1038 = vsel %vm953, %v1037, %v1013
        %v1039 = vsel %vm952, %v325, %v1036
        %v1040 = vsel %vm952, 0, %v1038
        %v1041 = vcosq.f32.pop %v1039
        %v1042 = vsinq.f32.pop %v1039
        %vm1043 = vweird.f32 %v325
        %v1044 = vand.u32 %v1040, 3
        %vm1045 = vcmp.lt.s32.totalorder %v1044, 2
        %vm1046 = vcmp.eq.s32.totalorder %v1044, 0
        %v1047 = vxor.u32 %v1042, 2147483648
        %v1048 = vsel %vm1046, %v1041, %v1047
        %vm1049 = vcmp.eq.s32.totalorder %v1044, 2
        %v1050 = vxor.u32 %v1041, 2147483648
        %v1051 = vsel %vm1049, %v1050, %v1042
        %v1052 = vsel %vm1045, %v1048, %v1051
        %v1053 = vsel %vm1043, nan, %v1052
        %v1054 = vand.u32 2147483647, %v327
        %vm1055 = vcmp.le.f32.partialorder %v1054, 0.7853982
        %vm1056 = vcmp.lt.s32.totalorder %v327, 0
        %v1057 = vand.u32 %v327, 2139095040
        %v1058 = vshrl.u32 %v1057, 23
        %v1059 = vsub.s32 %v1058, 127
        %v1060 = vand.u32 2147483647, %v327
        %v1061 = vand.u32 %v1060, 8388607
        %v1062 = vor.u32 %v1061, 8388608
        %v1063 = vsub.s32 0, %v1062
        %v1064 = vadd.s32 %v1059, 1
        %vm1065 = vcmp.gt.s32.totalorder %v1064, 0
        %v1066 = vsel %vm1065, %v1064, 0
        %v1067 = vshrl.u32 %v1066, 5
        %v1068 = vand.u32 %v1066, 31
        %v1069 = vsub.s32 32, %v1068
        %v1070 = vshrl.u32 683565275, %v1069
        %v1071 = vshll.u32 683565275, %v1068
        %v1072 = vshrl.u32 2475754826, %v1069
        %v1073 = vor.u32 %v1071, %v1072
        %v1074 = vshll.u32 2475754826, %v1068
        %v1075 = vshrl.u32 2131351028, %v1069
        %v1076 = vor.u32 %v1074, %v1075
        %v1077 = vshll.u32 2131351028, %v1068
        %v1078 = vshrl.u32 2102212464, %v1069
        %v1079 = vor.u32 %v1077, %v1078
        %v1080 = vshll.u32 2102212464, %v1068
        %v1081 = vshrl.u32 920167782, %v1069
        %v1082 = vor.u32 %v1080, %v1081
        %v1083 = vshll.u32 920167782, %v1068
        %v1084 = vshrl.u32 1326507024, %v1069
        %v1085 = vor.u32 %v1083, %v1084
        %vm1086 = vcmp.lt.s32.totalorder %v1067, 1
        %vm1087 = vcmp.lt.s32.totalorder %v1067, 2
        %vm1088 = vcmp.lt.s32.totalorder %v1067, 3
        %vm1089 = vcmp.lt.s32.totalorder %v1067, 4
        %v1090 = vsel %vm1086, %v1070, %v1073
        %v1091 = vsel %vm1089, %v1079, 2102212464
        %v1092 = vsel %vm1088, %v1076, %v1091
        %v1093 = vsel %vm1087, %v1090, %v1092
        %v1094 = vsel %vm1086, %v1073, %v1076
        %v1095 = vsel %vm1089, %v1082, 920167782
        %v1096 = vsel %vm1088, %v1079, %v1095
        %v1097 = vsel %vm1087, %v1094, %v1096
        %v1098 = vsel %vm1086, %v1076, %v1079
        %v1099 = vsel %vm1089, %v1085, 1326507024
        %v1100 = vsel %vm1088, %v1082, %v1099
        %v1101 = vsel %vm1087, %v1098, %v1100
        %v1102 = vshll.u32 %v1062, 8
        %v1103 = vmul.u32.u64.compose %v1102, %v1101
        %v1104 = vextract.low.u32 %v1103
        %v1105 = vextract.high.u32 %v1103
        %v1106 = vmul.u32.u64.compose %v1102, %v1097
        %v1107 = vextract.low.u32 %v1106
        %v1108 = vextract.high.u32 %v1106
        %v1109 = vmul.u32 %v1102, %v1093
        %v1110 = vadd.s32 %v1105, %v1107
        %vm1111 = vc.u32 %v1105, %v1107
        %v1112 = vadd.s32 %v1108, 1
        %v1113 = vsel %vm1111, %v1112, %v1108
        %v1114 = vadd.s32 %v1109, %v1113
        %v1115 = vadd.s32 %v1114, 536870912
        %v1116 = vshrl.u32 %v1115, 30
        %v1117 = vshll.u32 %v1116, 30
        %v1118 = vsub.s32 %v1114, %v1117
        %vm1119 = vcmp.lt.s32.totalorder %v1118, 0
        %v1120 = vsub.s32 0, %v1118
        %v1121 = vsel %vm1119, %v1120, %v1118
        %v1122 = vclz %v1121
        %v1123 = vsub.s32 %v1122, 2
        %vm1124 = vcmp.gt.s32.totalorder 0, %v1123
        %v1125 = vsel %vm1124, 0, %v1123
        %v1126 = vsub.s32 32, %v1125
        %v1127 = vshll.u32 %v1118, %v1125
        %v1128 = vshrl.u32 %v1110, %v1126
        %v1129 = vor.u32 %v1127, %v1128
        %v1130 = vsub.s32 4294967266, %v1125
        %v1131 = vadd.s32 %v1130, 127
        %v1132 = vshll.u32 %v1131, 23
        %v1133 = vor.u32 4788187, %v1132
        %v1134 = vand.u32 2147483647, %v1133
        %v1136 = vcvt.s32.f32 %v1129
        %v1137 = vmul.f32 %v1136, %v1134
        %v1138 = vxor.u32 %v1137, 2147483648
        %v1139 = vsel %vm1056, %v1138, %v1137
        %v1140 = vsub.s32 4, %v1116
        %v1141 = vsel %vm1056, %v1140, %v1116
        %v1142 = vsel %vm1055, %v327, %v1139
        %v1143 = vsel %vm1055, 0, %v1141
        %v1144 = vcosq.f32.pop %v1142
        %v1145 = vsinq.f32.pop %v1142
        %vm1146 = vweird.f32 %v327
        %v1147 = vand.u32 %v1143, 3
        %vm1148 = vcmp.lt.s32.totalorder %v1147, 2
        %vm1149 = vcmp.eq.s32.totalorder %v1147, 0
        %v1150 = vxor.u32 %v1145, 2147483648
        %v1151 = vsel %vm1149, %v1144, %v1150
        %vm1152 = vcmp.eq.s32.totalorder %v1147, 2
        %v1153 = vxor.u32 %v1144, 2147483648
        %v1154 = vsel %vm1152, %v1153, %v1145
        %v1155 = vsel %vm1148, %v1151, %v1154
        %v1156 = vsel %vm1146, nan, %v1155
        %v1157 = vld [vmem:[%s2 + $0x90] sm:$0xff]
        %v1158 = vld [vmem:[%s2 + $0x98] sm:$0xff]
        %v1159 = vld [vmem:[%s2 + $0xa0] sm:$0xff]
        %v1160 = vld [vmem:[%s2 + $0xa8] sm:$0xff]
        %v1161 = vld [vmem:[%s2 + $0x10] sm:$0xff]
        %v1162 = vld [vmem:[%s2 + $0x18] sm:$0xff]
        %v1163 = vld [vmem:[%s2 + $0x20] sm:$0xff]
        %v1164 = vld [vmem:[%s2 + $0x28] sm:$0xff]
        %v1165 = vld [vmem:[%s2 + $0x30] sm:$0xff]
        %v1166 = vld [vmem:[%s2 + $0x38] sm:$0xff]
        %v1167 = vld [vmem:[%s2 + $0x40] sm:$0xff]
        %v1168 = vld [vmem:[%s2 + $0x48] sm:$0xff]
        %vm1169 = vcmask 97280
        %v1171 = vsel %vm1169, %v1165, 0
        %v1174 = vsel %vm1169, %v1166, 0
        %v1177 = vsel %vm1169, %v1167, 0
        %v1180 = vsel %vm1169, %v1168, 0
        %vm1182 = vcmask 1043456
        %v1184 = vsel %vm1182, %v640, 0
        %v1187 = vsel %vm1182, %v744, 0
        %1189 = vmatprep.subr.mxu0 %v536
        %1190 = vmatpush1.msra.mxu0 %v432
        %1191 = vmatprep.subr.mxu0 %v1187
        %1192 = vmatpush1.msra.mxu0 %v1184
        %1193 = vmatprep.subr.mxu0 0.0
        %1194 = vmatpush1.msra.mxu0 0.0
        %1195 = vmatprep.subr.mxu0 0.0
        %1196 = vmatpush1.msra.mxu0 0.0
        %1197 = vmatprep.subr.mxu0 0.0
        %1198 = vmatpush1.msra.mxu0 0.0
        %1199 = vmatprep.subr.mxu0 0.0
        %1200 = vmatpush1.msra.mxu0 0.0
        %1201 = vmatprep.subr.mxu0 0.0
        %1202 = vmatpush1.msra.mxu0 0.0
        %1203 = vmatprep.subr.mxu0 0.0
        %1204 = vmatpush1.msra.mxu0 0.0
        %1205 = vmatprep.subr.mxu0 0.0
        %1206 = vmatpush1.msra.mxu0 0.0
        %1207 = vmatprep.subr.mxu0 0.0
        %1208 = vmatpush1.msra.mxu0 0.0
        %1209 = vmatprep.subr.mxu0 0.0
        %1210 = vmatpush1.msra.mxu0 0.0
        %1211 = vmatprep.subr.mxu0 0.0
        %1212 = vmatpush1.msra.mxu0 0.0
        %1213 = vmatprep.subr.mxu0 0.0
        %1214 = vmatpush1.msra.mxu0 0.0
        %1215 = vmatprep.subr.mxu0 0.0
        %1216 = vmatpush1.msra.mxu0 0.0
        %1217 = vmatprep.subr.mxu0 0.0
        %1218 = vmatpush1.msra.mxu0 0.0
        %1219 = vmatprep.subr.mxu0 0.0
        %1220 = vmatpush1.msra.mxu0 0.0
        %1221 = vmatprep.subr.mxu0 0.0
        %1222 = vmatpush1.msra.mxu0 0.0
        %1223 = vmatprep.subr.mxu0 0.0
        %1224 = vmatpush1.msra.mxu0 0.0
        %1225 = vmatprep.subr.mxu0 0.0
        %1226 = vmatpush1.msra.mxu0 0.0
        %1227 = vmatprep.subr.mxu0 0.0
        %1228 = vmatpush1.msra.mxu0 0.0
        %1229 = vmatprep.subr.mxu0 0.0
        %1230 = vmatpush1.msra.mxu0 0.0
        %1231 = vmatprep.subr.mxu0 0.0
        %1232 = vmatpush1.msra.mxu0 0.0
        %1233 = vmatprep.subr.mxu0 0.0
        %1234 = vmatpush1.msra.mxu0 0.0
        %1235 = vmatprep.subr.mxu0 0.0
        %1236 = vmatpush1.msra.mxu0 0.0
        %1237 = vmatprep.subr.mxu0 0.0
        %1238 = vmatpush1.msra.mxu0 0.0
        %1239 = vmatprep.subr.mxu0 0.0
        %1240 = vmatpush1.msra.mxu0 0.0
        %1241 = vmatprep.subr.mxu0 0.0
        %1242 = vmatpush1.msra.mxu0 0.0
        %1243 = vmatprep.subr.mxu0 0.0
        %1244 = vmatpush1.msra.mxu0 0.0
        %1245 = vmatprep.subr.mxu0 0.0
        %1246 = vmatpush1.msra.mxu0 0.0
        %1247 = vmatprep.subr.mxu0 0.0
        %1248 = vmatpush1.msra.mxu0 0.0
        %1249 = vmatprep.subr.mxu0 0.0
        %1250 = vmatpush1.msra.mxu0 0.0
        %1251 = vmatprep.subr.mxu0 0.0
        %1252 = vmatpush1.msra.mxu0 0.0
        %1253 = vmatprep.mubr.f32.mxu0 0.0
        %1254 = vmatmul.mubr.f32.gmra.mrb[0].mxu0 %v1171
        %v1255 = vpop.f32.mrb[0].mxu0
        %v1256 = vadd.f32 0.0, %v1255
        %v1257 = vpop.f32.mrb[0].mxu0
        %v1258 = vadd.f32 0.0, %v1257
        %1259 = vmatprep.mubr.f32.mxu0 0.0
        %1260 = vmatmul.mubr.f32.gmra.mrb[0].mxu0 %v1174
        %v1261 = vpop.f32.mrb[0].mxu0
        %v1262 = vadd.f32 0.0, %v1261
        %v1263 = vpop.f32.mrb[0].mxu0
        %v1264 = vadd.f32 0.0, %v1263
        %1265 = vmatprep.mubr.f32.mxu0 0.0
        %1266 = vmatmul.mubr.f32.gmra.mrb[0].mxu0 %v1177
        %v1267 = vpop.f32.mrb[0].mxu0
        %v1268 = vadd.f32 0.0, %v1267
        %v1269 = vpop.f32.mrb[0].mxu0
        %v1270 = vadd.f32 0.0, %v1269
        %1271 = vmatprep.mubr.f32.mxu0 0.0
        %1272 = vmatmul.mubr.f32.gmra.mrb[0].mxu0 %v1180
        %v1273 = vpop.f32.mrb[0].mxu0
        %v1274 = vadd.f32 0.0, %v1273
        %v1275 = vpop.f32.mrb[0].mxu0
        %v1276 = vadd.f32 0.0, %v1275
        %1277 = vdwg.mxu0
        %v1279 = vsel %vm238, %v1161, 0
        %v1282 = vsel %vm238, %v1162, 0
        %v1285 = vsel %vm238, %v1163, 0
        %v1288 = vsel %vm238, %v1164, 0
        %1290 = vmatprep.subr.mxu0 %v250
        %1291 = vmatpush1.msra.mxu0 %v247
        %1292 = vmatprep.subr.mxu0 0.0
        %1293 = vmatpush1.msra.mxu0 0.0
        %1294 = vmatprep.subr.mxu0 0.0
        %1295 = vmatpush1.msra.mxu0 0.0
        %1296 = vmatprep.subr.mxu0 0.0
        %1297 = vmatpush1.msra.mxu0 0.0
        %1298 = vmatprep.subr.mxu0 0.0
        %1299 = vmatpush1.msra.mxu0 0.0
        %1300 = vmatprep.subr.mxu0 0.0
        %1301 = vmatpush1.msra.mxu0 0.0
        %1302 = vmatprep.subr.mxu0 0.0
        %1303 = vmatpush1.msra.mxu0 0.0
        %1304 = vmatprep.subr.mxu0 0.0
        %1305 = vmatpush1.msra.mxu0 0.0
        %1306 = vmatprep.subr.mxu0 0.0
        %1307 = vmatpush1.msra.mxu0 0.0
        %1308 = vmatprep.subr.mxu0 0.0
        %1309 = vmatpush1.msra.mxu0 0.0
        %1310 = vmatprep.subr.mxu0 0.0
        %1311 = vmatpush1.msra.mxu0 0.0
        %1312 = vmatprep.subr.mxu0 0.0
        %1313 = vmatpush1.msra.mxu0 0.0
        %1314 = vmatprep.subr.mxu0 0.0
        %1315 = vmatpush1.msra.mxu0 0.0
        %1316 = vmatprep.subr.mxu0 0.0
        %1317 = vmatpush1.msra.mxu0 0.0
        %1318 = vmatprep.subr.mxu0 0.0
        %1319 = vmatpush1.msra.mxu0 0.0
        %1320 = vmatprep.subr.mxu0 0.0
        %1321 = vmatpush1.msra.mxu0 0.0
        %1322 = vmatprep.subr.mxu0 0.0
        %1323 = vmatpush1.msra.mxu0 0.0
        %1324 = vmatprep.subr.mxu0 0.0
        %1325 = vmatpush1.msra.mxu0 0.0
        %1326 = vmatprep.subr.mxu0 0.0
        %1327 = vmatpush1.msra.mxu0 0.0
        %1328 = vmatprep.subr.mxu0 0.0
        %1329 = vmatpush1.msra.mxu0 0.0
        %1330 = vmatprep.subr.mxu0 0.0
        %1331 = vmatpush1.msra.mxu0 0.0
        %1332 = vmatprep.subr.mxu0 0.0
        %1333 = vmatpush1.msra.mxu0 0.0
        %1334 = vmatprep.subr.mxu0 0.0
        %1335 = vmatpush1.msra.mxu0 0.0
        %1336 = vmatprep.subr.mxu0 0.0
        %1337 = vmatpush1.msra.mxu0 0.0
        %1338 = vmatprep.subr.mxu0 0.0
        %1339 = vmatpush1.msra.mxu0 0.0
        %1340 = vmatprep.subr.mxu0 0.0
        %1341 = vmatpush1.msra.mxu0 0.0
        %1342 = vmatprep.subr.mxu0 0.0
        %1343 = vmatpush1.msra.mxu0 0.0
        %1344 = vmatprep.subr.mxu0 0.0
        %1345 = vmatpush1.msra.mxu0 0.0
        %1346 = vmatprep.subr.mxu0 0.0
        %1347 = vmatpush1.msra.mxu0 0.0
        %1348 = vmatprep.subr.mxu0 0.0
        %1349 = vmatpush1.msra.mxu0 0.0
        %1350 = vmatprep.subr.mxu0 0.0
        %1351 = vmatpush1.msra.mxu0 0.0
        %1352 = vmatprep.subr.mxu0 0.0
        %1353 = vmatpush1.msra.mxu0 0.0
        %1354 = vmatprep.mubr.f32.mxu0 0.0
        %1355 = vmatmul.mubr.f32.gmra.mrb[0].mxu0 %v1279
        %v1356 = vpop.f32.mrb[0].mxu0
        %v1357 = vadd.f32 %v1256, %v1356
        %v1358 = vpop.f32.mrb[0].mxu0
        %v1359 = vadd.f32 %v1258, %v1358
        %1360 = vmatprep.mubr.f32.mxu0 0.0
        %1361 = vmatmul.mubr.f32.gmra.mrb[0].mxu0 %v1282
        %v1362 = vpop.f32.mrb[0].mxu0
        %v1363 = vadd.f32 %v1262, %v1362
        %v1364 = vpop.f32.mrb[0].mxu0
        %v1365 = vadd.f32 %v1264, %v1364
        %1366 = vmatprep.mubr.f32.mxu0 0.0
        %1367 = vmatmul.mubr.f32.gmra.mrb[0].mxu0 %v1285
        %v1368 = vpop.f32.mrb[0].mxu0
        %v1369 = vadd.f32 %v1268, %v1368
        %v1370 = vpop.f32.mrb[0].mxu0
        %v1371 = vadd.f32 %v1270, %v1370
        %1372 = vmatprep.mubr.f32.mxu0 0.0
        %1373 = vmatmul.mubr.f32.gmra.mrb[0].mxu0 %v1288
        %v1374 = vpop.f32.mrb[0].mxu0
        %v1375 = vadd.f32 %v1274, %v1374
        %v1376 = vpop.f32.mrb[0].mxu0
        %v1377 = vadd.f32 %v1276, %v1376
        %1378 = vdwg.mxu0
        %v1379 = vld [vmem:[%s2 + $0x50] sm:$0xff]
        %v1380 = vld [vmem:[%s2 + $0x58] sm:$0xff]
        %v1381 = vld [vmem:[%s2 + $0x60] sm:$0xff]
        %v1382 = vld [vmem:[%s2 + $0x68] sm:$0xff]
        %v1384 = vsel %vm1169, %v1379, 0
        %v1387 = vsel %vm1169, %v1380, 0
        %v1390 = vsel %vm1169, %v1381, 0
        %v1393 = vsel %vm1169, %v1382, 0
        %v1396 = vsel %vm1182, %v1053, 0
        %v1399 = vsel %vm1182, %v1156, 0
        %1401 = vmatprep.subr.mxu0 %v950
        %1402 = vmatpush1.msra.mxu0 %v847
        %1403 = vmatprep.subr.mxu0 %v1399
        %1404 = vmatpush1.msra.mxu0 %v1396
        %1405 = vmatprep.subr.mxu0 0.0
        %1406 = vmatpush1.msra.mxu0 0.0
        %1407 = vmatprep.subr.mxu0 0.0
        %1408 = vmatpush1.msra.mxu0 0.0
        %1409 = vmatprep.subr.mxu0 0.0
        %1410 = vmatpush1.msra.mxu0 0.0
        %1411 = vmatprep.subr.mxu0 0.0
        %1412 = vmatpush1.msra.mxu0 0.0
        %1413 = vmatprep.subr.mxu0 0.0
        %1414 = vmatpush1.msra.mxu0 0.0
        %1415 = vmatprep.subr.mxu0 0.0
        %1416 = vmatpush1.msra.mxu0 0.0
        %1417 = vmatprep.subr.mxu0 0.0
        %1418 = vmatpush1.msra.mxu0 0.0
        %1419 = vmatprep.subr.mxu0 0.0
        %1420 = vmatpush1.msra.mxu0 0.0
        %1421 = vmatprep.subr.mxu0 0.0
        %1422 = vmatpush1.msra.mxu0 0.0
        %1423 = vmatprep.subr.mxu0 0.0
        %1424 = vmatpush1.msra.mxu0 0.0
        %1425 = vmatprep.subr.mxu0 0.0
        %1426 = vmatpush1.msra.mxu0 0.0
        %1427 = vmatprep.subr.mxu0 0.0
        %1428 = vmatpush1.msra.mxu0 0.0
        %1429 = vmatprep.subr.mxu0 0.0
        %1430 = vmatpush1.msra.mxu0 0.0
        %1431 = vmatprep.subr.mxu0 0.0
        %1432 = vmatpush1.msra.mxu0 0.0
        %1433 = vmatprep.subr.mxu0 0.0
        %1434 = vmatpush1.msra.mxu0 0.0
        %1435 = vmatprep.subr.mxu0 0.0
        %1436 = vmatpush1.msra.mxu0 0.0
        %1437 = vmatprep.subr.mxu0 0.0
        %1438 = vmatpush1.msra.mxu0 0.0
        %1439 = vmatprep.subr.mxu0 0.0
        %1440 = vmatpush1.msra.mxu0 0.0
        %1441 = vmatprep.subr.mxu0 0.0
        %1442 = vmatpush1.msra.mxu0 0.0
        %1443 = vmatprep.subr.mxu0 0.0
        %1444 = vmatpush1.msra.mxu0 0.0
        %1445 = vmatprep.subr.mxu0 0.0
        %1446 = vmatpush1.msra.mxu0 0.0
        %1447 = vmatprep.subr.mxu0 0.0
        %1448 = vmatpush1.msra.mxu0 0.0
        %1449 = vmatprep.subr.mxu0 0.0
        %1450 = vmatpush1.msra.mxu0 0.0
        %1451 = vmatprep.subr.mxu0 0.0
        %1452 = vmatpush1.msra.mxu0 0.0
        %1453 = vmatprep.subr.mxu0 0.0
        %1454 = vmatpush1.msra.mxu0 0.0
        %1455 = vmatprep.subr.mxu0 0.0
        %1456 = vmatpush1.msra.mxu0 0.0
        %1457 = vmatprep.subr.mxu0 0.0
        %1458 = vmatpush1.msra.mxu0 0.0
        %1459 = vmatprep.subr.mxu0 0.0
        %1460 = vmatpush1.msra.mxu0 0.0
        %1461 = vmatprep.subr.mxu0 0.0
        %1462 = vmatpush1.msra.mxu0 0.0
        %1463 = vmatprep.subr.mxu0 0.0
        %1464 = vmatpush1.msra.mxu0 0.0
        %1465 = vmatprep.mubr.f32.mxu0 0.0
        %1466 = vmatmul.mubr.f32.gmra.mrb[0].mxu0 %v1384
        %v1467 = vpop.f32.mrb[0].mxu0
        %v1468 = vadd.f32 0.0, %v1467
        %v1469 = vpop.f32.mrb[0].mxu0
        %v1470 = vadd.f32 0.0, %v1469
        %1471 = vmatprep.mubr.f32.mxu0 0.0
        %1472 = vmatmul.mubr.f32.gmra.mrb[0].mxu0 %v1387
        %v1473 = vpop.f32.mrb[0].mxu0
        %v1474 = vadd.f32 0.0, %v1473
        %v1475 = vpop.f32.mrb[0].mxu0
        %v1476 = vadd.f32 0.0, %v1475
        %1477 = vmatprep.mubr.f32.mxu0 0.0
        %1478 = vmatmul.mubr.f32.gmra.mrb[0].mxu0 %v1390
        %v1479 = vpop.f32.mrb[0].mxu0
        %v1480 = vadd.f32 0.0, %v1479
        %v1481 = vpop.f32.mrb[0].mxu0
        %v1482 = vadd.f32 0.0, %v1481
        %1483 = vmatprep.mubr.f32.mxu0 0.0
        %1484 = vmatmul.mubr.f32.gmra.mrb[0].mxu0 %v1393
        %v1485 = vpop.f32.mrb[0].mxu0
        %v1486 = vadd.f32 0.0, %v1485
        %v1487 = vpop.f32.mrb[0].mxu0
        %v1488 = vadd.f32 0.0, %v1487
        %1489 = vdwg.mxu0
        %v1490 = vadd.f32 %v1357, %v1468
        %v1491 = vadd.f32 %v1359, %v1470
        %v1492 = vadd.f32 %v1363, %v1474
        %v1493 = vadd.f32 %v1365, %v1476
        %v1494 = vadd.f32 %v1369, %v1480
        %v1495 = vadd.f32 %v1371, %v1482
        %v1496 = vadd.f32 %v1375, %v1486
        %v1497 = vadd.f32 %v1377, %v1488
        %v1498 = vld [vmem:[%s2 + $0x70] sm:$0xff]
        %v1499 = vld [vmem:[%s2 + $0x78] sm:$0xff]
        %v1500 = vld [vmem:[%s2 + $0x80] sm:$0xff]
        %v1501 = vld [vmem:[%s2 + $0x88] sm:$0xff]
        %vm1502 = vcmask 130048
        %v1504 = vsel %vm1502, %v1498, 0
        %v1507 = vsel %vm1502, %v1499, 0
        %v1510 = vsel %vm1502, %v1500, 0
        %v1513 = vsel %vm1502, %v1501, 0
        %1515 = vmatprep.subr.mxu0 %v233
        %1516 = vmatpush1.msra.mxu0 %v232
        %1517 = vmatprep.subr.mxu0 %v235
        %1518 = vmatpush1.msra.mxu0 %v234
        %1519 = vmatprep.subr.mxu0 0.0
        %1520 = vmatpush1.msra.mxu0 0.0
        %1521 = vmatprep.subr.mxu0 0.0
        %1522 = vmatpush1.msra.mxu0 0.0
        %1523 = vmatprep.subr.mxu0 0.0
        %1524 = vmatpush1.msra.mxu0 0.0
        %1525 = vmatprep.subr.mxu0 0.0
        %1526 = vmatpush1.msra.mxu0 0.0
        %1527 = vmatprep.subr.mxu0 0.0
        %1528 = vmatpush1.msra.mxu0 0.0
        %1529 = vmatprep.subr.mxu0 0.0
        %1530 = vmatpush1.msra.mxu0 0.0
        %1531 = vmatprep.subr.mxu0 0.0
        %1532 = vmatpush1.msra.mxu0 0.0
        %1533 = vmatprep.subr.mxu0 0.0
        %1534 = vmatpush1.msra.mxu0 0.0
        %1535 = vmatprep.subr.mxu0 0.0
        %1536 = vmatpush1.msra.mxu0 0.0
        %1537 = vmatprep.subr.mxu0 0.0
        %1538 = vmatpush1.msra.mxu0 0.0
        %1539 = vmatprep.subr.mxu0 0.0
        %1540 = vmatpush1.msra.mxu0 0.0
        %1541 = vmatprep.subr.mxu0 0.0
        %1542 = vmatpush1.msra.mxu0 0.0
        %1543 = vmatprep.subr.mxu0 0.0
        %1544 = vmatpush1.msra.mxu0 0.0
        %1545 = vmatprep.subr.mxu0 0.0
        %1546 = vmatpush1.msra.mxu0 0.0
        %1547 = vmatprep.subr.mxu0 0.0
        %1548 = vmatpush1.msra.mxu0 0.0
        %1549 = vmatprep.subr.mxu0 0.0
        %1550 = vmatpush1.msra.mxu0 0.0
        %1551 = vmatprep.subr.mxu0 0.0
        %1552 = vmatpush1.msra.mxu0 0.0
        %1553 = vmatprep.subr.mxu0 0.0
        %1554 = vmatpush1.msra.mxu0 0.0
        %1555 = vmatprep.subr.mxu0 0.0
        %1556 = vmatpush1.msra.mxu0 0.0
        %1557 = vmatprep.subr.mxu0 0.0
        %1558 = vmatpush1.msra.mxu0 0.0
        %1559 = vmatprep.subr.mxu0 0.0
        %1560 = vmatpush1.msra.mxu0 0.0
        %1561 = vmatprep.subr.mxu0 0.0
        %1562 = vmatpush1.msra.mxu0 0.0
        %1563 = vmatprep.subr.mxu0 0.0
        %1564 = vmatpush1.msra.mxu0 0.0
        %1565 = vmatprep.subr.mxu0 0.0
        %1566 = vmatpush1.msra.mxu0 0.0
        %1567 = vmatprep.subr.mxu0 0.0
        %1568 = vmatpush1.msra.mxu0 0.0
        %1569 = vmatprep.subr.mxu0 0.0
        %1570 = vmatpush1.msra.mxu0 0.0
        %1571 = vmatprep.subr.mxu0 0.0
        %1572 = vmatpush1.msra.mxu0 0.0
        %1573 = vmatprep.subr.mxu0 0.0
        %1574 = vmatpush1.msra.mxu0 0.0
        %1575 = vmatprep.subr.mxu0 0.0
        %1576 = vmatpush1.msra.mxu0 0.0
        %1577 = vmatprep.subr.mxu0 0.0
        %1578 = vmatpush1.msra.mxu0 0.0
        %1579 = vmatprep.mubr.f32.mxu0 0.0
        %1580 = vmatmul.mubr.f32.gmra.mrb[0].mxu0 %v1504
        %v1581 = vpop.f32.mrb[0].mxu0
        %v1582 = vadd.f32 0.0, %v1581
        %v1583 = vpop.f32.mrb[0].mxu0
        %v1584 = vadd.f32 0.0, %v1583
        %1585 = vmatprep.mubr.f32.mxu0 0.0
        %1586 = vmatmul.mubr.f32.gmra.mrb[0].mxu0 %v1507
        %v1587 = vpop.f32.mrb[0].mxu0
        %v1588 = vadd.f32 0.0, %v1587
        %v1589 = vpop.f32.mrb[0].mxu0
        %v1590 = vadd.f32 0.0, %v1589
        %1591 = vmatprep.mubr.f32.mxu0 0.0
        %1592 = vmatmul.mubr.f32.gmra.mrb[0].mxu0 %v1510
        %v1593 = vpop.f32.mrb[0].mxu0
        %v1594 = vadd.f32 0.0, %v1593
        %v1595 = vpop.f32.mrb[0].mxu0
        %v1596 = vadd.f32 0.0, %v1595
        %1597 = vmatprep.mubr.f32.mxu0 0.0
        %1598 = vmatmul.mubr.f32.gmra.mrb[0].mxu0 %v1513
        %v1599 = vpop.f32.mrb[0].mxu0
        %v1600 = vadd.f32 0.0, %v1599
        %v1601 = vpop.f32.mrb[0].mxu0
        %v1602 = vadd.f32 0.0, %v1601
        %1603 = vdwg.mxu0
        %v1604 = vadd.f32 %v1490, %v1582
        %v1605 = vadd.f32 %v1491, %v1584
        %v1606 = vadd.f32 %v1492, %v1588
        %v1607 = vadd.f32 %v1493, %v1590
        %v1608 = vadd.f32 %v1494, %v1594
        %v1609 = vadd.f32 %v1495, %v1596
        %v1610 = vadd.f32 %v1496, %v1600
        %v1611 = vadd.f32 %v1497, %v1602
        %1613 = vset.pattern.permute.xlu0 0
        %1614 = vperm.xlu0 %1613, %v1157
        %v1615 = vpop.permute.xlu0 %1614
        %1618 = vset.pattern.permute.xlu0 0
        %1619 = vperm.xlu0 %1618, %v1158
        %v1620 = vpop.permute.xlu0 %1619
        %1623 = vset.pattern.permute.xlu0 0
        %1624 = vperm.xlu0 %1623, %v1159
        %v1625 = vpop.permute.xlu0 %1624
        %1628 = vset.pattern.permute.xlu0 0
        %1629 = vperm.xlu0 %1628, %v1160
        %v1630 = vpop.permute.xlu0 %1629
        %v1632 = vadd.f32 %v1615, %v1604
        %v1633 = vadd.f32 %v1615, %v1605
        %v1634 = vadd.f32 %v1620, %v1606
        %v1635 = vadd.f32 %v1620, %v1607
        %v1636 = vadd.f32 %v1625, %v1608
        %v1637 = vadd.f32 %v1625, %v1609
        %v1638 = vadd.f32 %v1630, %v1610
        %v1639 = vadd.f32 %v1630, %v1611
        %v1640 = vmul.f32 %v1632, 100.0
        %v1641 = vmul.f32 %v1633, 100.0
        %v1642 = vmul.f32 %v1634, 100.0
        %v1643 = vmul.f32 %v1635, 100.0
        %v1644 = vmul.f32 %v1636, 100.0
        %v1645 = vmul.f32 %v1637, 100.0
        %v1646 = vmul.f32 %v1638, 100.0
        %v1647 = vmul.f32 %v1639, 100.0
        %vm1648 = vcmp.gt.f32.partialorder %v1640, 20.0
        %vm1649 = vcmp.gt.f32.partialorder %v1641, 20.0
        %vm1650 = vcmp.gt.f32.partialorder %v1642, 20.0
        %vm1651 = vcmp.gt.f32.partialorder %v1643, 20.0
        %vm1652 = vcmp.gt.f32.partialorder %v1644, 20.0
        %vm1653 = vcmp.gt.f32.partialorder %v1645, 20.0
        %vm1654 = vcmp.gt.f32.partialorder %v1646, 20.0
        %vm1655 = vcmp.gt.f32.partialorder %v1647, 20.0
        %v1656 = vmul.f32 %v1640, 1.442695
        %v1657 = vpow.pop %v1656
        %v1658 = vmul.f32 %v1641, 1.442695
        %v1659 = vpow.pop %v1658
        %v1660 = vmul.f32 %v1642, 1.442695
        %v1661 = vpow.pop %v1660
        %v1662 = vmul.f32 %v1643, 1.442695
        %v1663 = vpow.pop %v1662
        %v1664 = vmul.f32 %v1644, 1.442695
        %v1665 = vpow.pop %v1664
        %v1666 = vmul.f32 %v1645, 1.442695
        %v1667 = vpow.pop %v1666
        %v1668 = vmul.f32 %v1646, 1.442695
        %v1669 = vpow.pop %v1668
        %v1670 = vmul.f32 %v1647, 1.442695
        %v1671 = vpow.pop %v1670
        %v1672 = vadd.f32 %v1657, 1.0
        %v1673 = vlog2.pop %v1672
        %v1674 = vmul.f32 %v1673, 0.6931472
        %v1675 = vmul.f32 -0.5, %v1657
        %v1676 = vadd.f32 %v1675, 1.0
        %v1677 = vmul.f32 %v1676, %v1657
        %v1678 = vand.u32 2147483647, %v1657
        %vm1679 = vcmp.lt.f32.partialorder %v1678, 0.0004427343
        %v1680 = vsel %vm1679, %v1677, %v1674
        %v1681 = vadd.f32 %v1659, 1.0
        %v1682 = vlog2.pop %v1681
        %v1683 = vmul.f32 %v1682, 0.6931472
        %v1684 = vmul.f32 -0.5, %v1659
        %v1685 = vadd.f32 %v1684, 1.0
        %v1686 = vmul.f32 %v1685, %v1659
        %v1687 = vand.u32 2147483647, %v1659
        %vm1688 = vcmp.lt.f32.partialorder %v1687, 0.0004427343
        %v1689 = vsel %vm1688, %v1686, %v1683
        %v1690 = vadd.f32 %v1661, 1.0
        %v1691 = vlog2.pop %v1690
        %v1692 = vmul.f32 %v1691, 0.6931472
        %v1693 = vmul.f32 -0.5, %v1661
        %v1694 = vadd.f32 %v1693, 1.0
        %v1695 = vmul.f32 %v1694, %v1661
        %v1696 = vand.u32 2147483647, %v1661
        %vm1697 = vcmp.lt.f32.partialorder %v1696, 0.0004427343
        %v1698 = vsel %vm1697, %v1695, %v1692
        %v1699 = vadd.f32 %v1663, 1.0
        %v1700 = vlog2.pop %v1699
        %v1701 = vmul.f32 %v1700, 0.6931472
        %v1702 = vmul.f32 -0.5, %v1663
        %v1703 = vadd.f32 %v1702, 1.0
        %v1704 = vmul.f32 %v1703, %v1663
        %v1705 = vand.u32 2147483647, %v1663
        %vm1706 = vcmp.lt.f32.partialorder %v1705, 0.0004427343
        %v1707 = vsel %vm1706, %v1704, %v1701
        %v1708 = vadd.f32 %v1665, 1.0
        %v1709 = vlog2.pop %v1708
        %v1710 = vmul.f32 %v1709, 0.6931472
        %v1711 = vmul.f32 -0.5, %v1665
        %v1712 = vadd.f32 %v1711, 1.0
        %v1713 = vmul.f32 %v1712, %v1665
        %v1714 = vand.u32 2147483647, %v1665
        %vm1715 = vcmp.lt.f32.partialorder %v1714, 0.0004427343
        %v1716 = vsel %vm1715, %v1713, %v1710
        %v1717 = vadd.f32 %v1667, 1.0
        %v1718 = vlog2.pop %v1717
        %v1719 = vmul.f32 %v1718, 0.6931472
        %v1720 = vmul.f32 -0.5, %v1667
        %v1721 = vadd.f32 %v1720, 1.0
        %v1722 = vmul.f32 %v1721, %v1667
        %v1723 = vand.u32 2147483647, %v1667
        %vm1724 = vcmp.lt.f32.partialorder %v1723, 0.0004427343
        %v1725 = vsel %vm1724, %v1722, %v1719
        %v1726 = vadd.f32 %v1669, 1.0
        %v1727 = vlog2.pop %v1726
        %v1728 = vmul.f32 %v1727, 0.6931472
        %v1729 = vmul.f32 -0.5, %v1669
        %v1730 = vadd.f32 %v1729, 1.0
        %v1731 = vmul.f32 %v1730, %v1669
        %v1732 = vand.u32 2147483647, %v1669
        %vm1733 = vcmp.lt.f32.partialorder %v1732, 0.0004427343
        %v1734 = vsel %vm1733, %v1731, %v1728
        %v1735 = vadd.f32 %v1671, 1.0
        %v1736 = vlog2.pop %v1735
        %v1737 = vmul.f32 %v1736, 0.6931472
        %v1738 = vmul.f32 -0.5, %v1671
        %v1739 = vadd.f32 %v1738, 1.0
        %v1740 = vmul.f32 %v1739, %v1671
        %v1741 = vand.u32 2147483647, %v1671
        %vm1742 = vcmp.lt.f32.partialorder %v1741, 0.0004427343
        %v1743 = vsel %vm1742, %v1740, %v1737
        %v1744 = vmul.f32 %v1680, 0.01
        %v1745 = vmul.f32 %v1689, 0.01
        %v1746 = vmul.f32 %v1698, 0.01
        %v1747 = vmul.f32 %v1707, 0.01
        %v1748 = vmul.f32 %v1716, 0.01
        %v1749 = vmul.f32 %v1725, 0.01
        %v1750 = vmul.f32 %v1734, 0.01
        %v1751 = vmul.f32 %v1743, 0.01
        %v1752 = vsel %vm1648, %v1632, %v1744
        %v1753 = vsel %vm1649, %v1633, %v1745
        %v1754 = vsel %vm1650, %v1634, %v1746
        %v1755 = vsel %vm1651, %v1635, %v1747
        %v1756 = vsel %vm1652, %v1636, %v1748
        %v1757 = vsel %vm1653, %v1637, %v1749
        %v1758 = vsel %vm1654, %v1638, %v1750
        %v1759 = vsel %vm1655, %v1639, %v1751
        %v1760 = vld [vmem:[%s2 + $0xd0] sm:$0xff]
        %v1761 = vld [vmem:[%s2 + $0xd8] sm:$0xff]
        %v1762 = vld [vmem:[%s2 + $0xe0] sm:$0xff]
        %v1763 = vld [vmem:[%s2 + $0xe8] sm:$0xff]
        %v1764 = vld [vmem:[%s2 + $0xb0] sm:$0xff]
        %v1765 = vld [vmem:[%s2 + $0xb8] sm:$0xff]
        %v1766 = vld [vmem:[%s2 + $0xc0] sm:$0xff]
        %v1767 = vld [vmem:[%s2 + $0xc8] sm:$0xff]
        %vm1768 = vcmask 261120
        %v1770 = vsel %vm1768, %v1764, 0
        %v1773 = vsel %vm1768, %v1765, 0
        %v1776 = vsel %vm1768, %v1766, 0
        %v1779 = vsel %vm1768, %v1767, 0
        %1781 = vmatprep.subr.mxu0 %v1753
        %1782 = vmatpush1.msra.mxu0 %v1752
        %1783 = vmatprep.subr.mxu0 %v1755
        %1784 = vmatpush1.msra.mxu0 %v1754
        %1785 = vmatprep.subr.mxu0 %v1757
        %1786 = vmatpush1.msra.mxu0 %v1756
        %1787 = vmatprep.subr.mxu0 %v1759
        %1788 = vmatpush1.msra.mxu0 %v1758
        %1789 = vmatprep.subr.mxu0 0.0
        %1790 = vmatpush1.msra.mxu0 0.0
        %1791 = vmatprep.subr.mxu0 0.0
        %1792 = vmatpush1.msra.mxu0 0.0
        %1793 = vmatprep.subr.mxu0 0.0
        %1794 = vmatpush1.msra.mxu0 0.0
        %1795 = vmatprep.subr.mxu0 0.0
        %1796 = vmatpush1.msra.mxu0 0.0
        %1797 = vmatprep.subr.mxu0 0.0
        %1798 = vmatpush1.msra.mxu0 0.0
        %1799 = vmatprep.subr.mxu0 0.0
        %1800 = vmatpush1.msra.mxu0 0.0
        %1801 = vmatprep.subr.mxu0 0.0
        %1802 = vmatpush1.msra.mxu0 0.0
        %1803 = vmatprep.subr.mxu0 0.0
        %1804 = vmatpush1.msra.mxu0 0.0
        %1805 = vmatprep.subr.mxu0 0.0
        %1806 = vmatpush1.msra.mxu0 0.0
        %1807 = vmatprep.subr.mxu0 0.0
        %1808 = vmatpush1.msra.mxu0 0.0
        %1809 = vmatprep.subr.mxu0 0.0
        %1810 = vmatpush1.msra.mxu0 0.0
        %1811 = vmatprep.subr.mxu0 0.0
        %1812 = vmatpush1.msra.mxu0 0.0
        %1813 = vmatprep.subr.mxu0 0.0
        %1814 = vmatpush1.msra.mxu0 0.0
        %1815 = vmatprep.subr.mxu0 0.0
        %1816 = vmatpush1.msra.mxu0 0.0
        %1817 = vmatprep.subr.mxu0 0.0
        %1818 = vmatpush1.msra.mxu0 0.0
        %1819 = vmatprep.subr.mxu0 0.0
        %1820 = vmatpush1.msra.mxu0 0.0
        %1821 = vmatprep.subr.mxu0 0.0
        %1822 = vmatpush1.msra.mxu0 0.0
        %1823 = vmatprep.subr.mxu0 0.0
        %1824 = vmatpush1.msra.mxu0 0.0
        %1825 = vmatprep.subr.mxu0 0.0
        %1826 = vmatpush1.msra.mxu0 0.0
        %1827 = vmatprep.subr.mxu0 0.0
        %1828 = vmatpush1.msra.mxu0 0.0
        %1829 = vmatprep.subr.mxu0 0.0
        %1830 = vmatpush1.msra.mxu0 0.0
        %1831 = vmatprep.subr.mxu0 0.0
        %1832 = vmatpush1.msra.mxu0 0.0
        %1833 = vmatprep.subr.mxu0 0.0
        %1834 = vmatpush1.msra.mxu0 0.0
        %1835 = vmatprep.subr.mxu0 0.0
        %1836 = vmatpush1.msra.mxu0 0.0
        %1837 = vmatprep.subr.mxu0 0.0
        %1838 = vmatpush1.msra.mxu0 0.0
        %1839 = vmatprep.subr.mxu0 0.0
        %1840 = vmatpush1.msra.mxu0 0.0
        %1841 = vmatprep.subr.mxu0 0.0
        %1842 = vmatpush1.msra.mxu0 0.0
        %1843 = vmatprep.subr.mxu0 0.0
        %1844 = vmatpush1.msra.mxu0 0.0
        %1845 = vmatprep.mubr.f32.mxu0 0.0
        %1846 = vmatmul.mubr.f32.gmra.mrb[0].mxu0 %v1770
        %v1847 = vpop.f32.mrb[0].mxu0
        %v1848 = vadd.f32 0.0, %v1847
        %v1849 = vpop.f32.mrb[0].mxu0
        %v1850 = vadd.f32 0.0, %v1849
        %1851 = vmatprep.mubr.f32.mxu0 0.0
        %1852 = vmatmul.mubr.f32.gmra.mrb[0].mxu0 %v1773
        %v1853 = vpop.f32.mrb[0].mxu0
        %v1854 = vadd.f32 0.0, %v1853
        %v1855 = vpop.f32.mrb[0].mxu0
        %v1856 = vadd.f32 0.0, %v1855
        %1857 = vmatprep.mubr.f32.mxu0 0.0
        %1858 = vmatmul.mubr.f32.gmra.mrb[0].mxu0 %v1776
        %v1859 = vpop.f32.mrb[0].mxu0
        %v1860 = vadd.f32 0.0, %v1859
        %v1861 = vpop.f32.mrb[0].mxu0
        %v1862 = vadd.f32 0.0, %v1861
        %1863 = vmatprep.mubr.f32.mxu0 0.0
        %1864 = vmatmul.mubr.f32.gmra.mrb[0].mxu0 %v1779
        %v1865 = vpop.f32.mrb[0].mxu0
        %v1866 = vadd.f32 0.0, %v1865
        %v1867 = vpop.f32.mrb[0].mxu0
        %v1868 = vadd.f32 0.0, %v1867
        %1869 = vdwg.mxu0
        %1871 = vset.pattern.permute.xlu0 0
        %1872 = vperm.xlu0 %1871, %v1760
        %v1873 = vpop.permute.xlu0 %1872
        %1876 = vset.pattern.permute.xlu0 0
        %1877 = vperm.xlu0 %1876, %v1761
        %v1878 = vpop.permute.xlu0 %1877
        %1881 = vset.pattern.permute.xlu0 0
        %1882 = vperm.xlu0 %1881, %v1762
        %v1883 = vpop.permute.xlu0 %1882
        %1886 = vset.pattern.permute.xlu0 0
        %1887 = vperm.xlu0 %1886, %v1763
        %v1888 = vpop.permute.xlu0 %1887
        %v1890 = vadd.f32 %v1873, %v1848
        %v1891 = vadd.f32 %v1873, %v1850
        %v1892 = vadd.f32 %v1878, %v1854
        %v1893 = vadd.f32 %v1878, %v1856
        %v1894 = vadd.f32 %v1883, %v1860
        %v1895 = vadd.f32 %v1883, %v1862
        %v1896 = vadd.f32 %v1888, %v1866
        %v1897 = vadd.f32 %v1888, %v1868
        %v1898 = vmul.f32 %v1890, 100.0
        %v1899 = vmul.f32 %v1891, 100.0
        %v1900 = vmul.f32 %v1892, 100.0
        %v1901 = vmul.f32 %v1893, 100.0
        %v1902 = vmul.f32 %v1894, 100.0
        %v1903 = vmul.f32 %v1895, 100.0
        %v1904 = vmul.f32 %v1896, 100.0
        %v1905 = vmul.f32 %v1897, 100.0
        %vm1906 = vcmp.gt.f32.partialorder %v1898, 20.0
        %vm1907 = vcmp.gt.f32.partialorder %v1899, 20.0
        %vm1908 = vcmp.gt.f32.partialorder %v1900, 20.0
        %vm1909 = vcmp.gt.f32.partialorder %v1901, 20.0
        %vm1910 = vcmp.gt.f32.partialorder %v1902, 20.0
        %vm1911 = vcmp.gt.f32.partialorder %v1903, 20.0
        %vm1912 = vcmp.gt.f32.partialorder %v1904, 20.0
        %vm1913 = vcmp.gt.f32.partialorder %v1905, 20.0
        %v1914 = vmul.f32 %v1898, 1.442695
        %v1915 = vpow.pop %v1914
        %v1916 = vmul.f32 %v1899, 1.442695
        %v1917 = vpow.pop %v1916
        %v1918 = vmul.f32 %v1900, 1.442695
        %v1919 = vpow.pop %v1918
        %v1920 = vmul.f32 %v1901, 1.442695
        %v1921 = vpow.pop %v1920
        %v1922 = vmul.f32 %v1902, 1.442695
        %v1923 = vpow.pop %v1922
        %v1924 = vmul.f32 %v1903, 1.442695
        %v1925 = vpow.pop %v1924
        %v1926 = vmul.f32 %v1904, 1.442695
        %v1927 = vpow.pop %v1926
        %v1928 = vmul.f32 %v1905, 1.442695
        %v1929 = vpow.pop %v1928
        %v1930 = vadd.f32 %v1915, 1.0
        %v1931 = vlog2.pop %v1930
        %v1932 = vmul.f32 %v1931, 0.6931472
        %v1933 = vmul.f32 -0.5, %v1915
        %v1934 = vadd.f32 %v1933, 1.0
        %v1935 = vmul.f32 %v1934, %v1915
        %v1936 = vand.u32 2147483647, %v1915
        %vm1937 = vcmp.lt.f32.partialorder %v1936, 0.0004427343
        %v1938 = vsel %vm1937, %v1935, %v1932
        %v1939 = vadd.f32 %v1917, 1.0
        %v1940 = vlog2.pop %v1939
        %v1941 = vmul.f32 %v1940, 0.6931472
        %v1942 = vmul.f32 -0.5, %v1917
        %v1943 = vadd.f32 %v1942, 1.0
        %v1944 = vmul.f32 %v1943, %v1917
        %v1945 = vand.u32 2147483647, %v1917
        %vm1946 = vcmp.lt.f32.partialorder %v1945, 0.0004427343
        %v1947 = vsel %vm1946, %v1944, %v1941
        %v1948 = vadd.f32 %v1919, 1.0
        %v1949 = vlog2.pop %v1948
        %v1950 = vmul.f32 %v1949, 0.6931472
        %v1951 = vmul.f32 -0.5, %v1919
        %v1952 = vadd.f32 %v1951, 1.0
        %v1953 = vmul.f32 %v1952, %v1919
        %v1954 = vand.u32 2147483647, %v1919
        %vm1955 = vcmp.lt.f32.partialorder %v1954, 0.0004427343
        %v1956 = vsel %vm1955, %v1953, %v1950
        %v1957 = vadd.f32 %v1921, 1.0
        %v1958 = vlog2.pop %v1957
        %v1959 = vmul.f32 %v1958, 0.6931472
        %v1960 = vmul.f32 -0.5, %v1921
        %v1961 = vadd.f32 %v1960, 1.0
        %v1962 = vmul.f32 %v1961, %v1921
        %v1963 = vand.u32 2147483647, %v1921
        %vm1964 = vcmp.lt.f32.partialorder %v1963, 0.0004427343
        %v1965 = vsel %vm1964, %v1962, %v1959
        %v1966 = vadd.f32 %v1923, 1.0
        %v1967 = vlog2.pop %v1966
        %v1968 = vmul.f32 %v1967, 0.6931472
        %v1969 = vmul.f32 -0.5, %v1923
        %v1970 = vadd.f32 %v1969, 1.0
        %v1971 = vmul.f32 %v1970, %v1923
        %v1972 = vand.u32 2147483647, %v1923
        %vm1973 = vcmp.lt.f32.partialorder %v1972, 0.0004427343
        %v1974 = vsel %vm1973, %v1971, %v1968
        %v1975 = vadd.f32 %v1925, 1.0
        %v1976 = vlog2.pop %v1975
        %v1977 = vmul.f32 %v1976, 0.6931472
        %v1978 = vmul.f32 -0.5, %v1925
        %v1979 = vadd.f32 %v1978, 1.0
        %v1980 = vmul.f32 %v1979, %v1925
        %v1981 = vand.u32 2147483647, %v1925
        %vm1982 = vcmp.lt.f32.partialorder %v1981, 0.0004427343
        %v1983 = vsel %vm1982, %v1980, %v1977
        %v1984 = vadd.f32 %v1927, 1.0
        %v1985 = vlog2.pop %v1984
        %v1986 = vmul.f32 %v1985, 0.6931472
        %v1987 = vmul.f32 -0.5, %v1927
        %v1988 = vadd.f32 %v1987, 1.0
        %v1989 = vmul.f32 %v1988, %v1927
        %v1990 = vand.u32 2147483647, %v1927
        %vm1991 = vcmp.lt.f32.partialorder %v1990, 0.0004427343
        %v1992 = vsel %vm1991, %v1989, %v1986
        %v1993 = vadd.f32 %v1929, 1.0
        %v1994 = vlog2.pop %v1993
        %v1995 = vmul.f32 %v1994, 0.6931472
        %v1996 = vmul.f32 -0.5, %v1929
        %v1997 = vadd.f32 %v1996, 1.0
        %v1998 = vmul.f32 %v1997, %v1929
        %v1999 = vand.u32 2147483647, %v1929
        %vm2000 = vcmp.lt.f32.partialorder %v1999, 0.0004427343
        %v2001 = vsel %vm2000, %v1998, %v1995
        %v2002 = vmul.f32 %v1938, 0.01
        %v2003 = vmul.f32 %v1947, 0.01
        %v2004 = vmul.f32 %v1956, 0.01
        %v2005 = vmul.f32 %v1965, 0.01
        %v2006 = vmul.f32 %v1974, 0.01
        %v2007 = vmul.f32 %v1983, 0.01
        %v2008 = vmul.f32 %v1992, 0.01
        %v2009 = vmul.f32 %v2001, 0.01
        %v2010 = vsel %vm1906, %v1890, %v2002
        %v2011 = vsel %vm1907, %v1891, %v2003
        %v2012 = vsel %vm1908, %v1892, %v2004
        %v2013 = vsel %vm1909, %v1893, %v2005
        %v2014 = vsel %vm1910, %v1894, %v2006
        %v2015 = vsel %vm1911, %v1895, %v2007
        %v2016 = vsel %vm1912, %v1896, %v2008
        %v2017 = vsel %vm1913, %v1897, %v2009
        %v2018 = vld [vmem:[%s2 + $0x190] sm:$0xff]
        %v2019 = vld [vmem:[%s2 + $0x198] sm:$0xff]
        %v2020 = vld [vmem:[%s2 + $0x1a0] sm:$0xff]
        %v2021 = vld [vmem:[%s2 + $0x1a8] sm:$0xff]
        %v2022 = vld [vmem:[%s2 + $0xf0] sm:$0xff]
        %v2023 = vld [vmem:[%s2 + $0xf8] sm:$0xff]
        %v2024 = vld [vmem:[%s2 + $0x100] sm:$0xff]
        %v2025 = vld [vmem:[%s2 + $0x108] sm:$0xff]
        %v2027 = vsel %vm1768, %v2022, 0
        %v2030 = vsel %vm1768, %v2023, 0
        %v2033 = vsel %vm1768, %v2024, 0
        %v2036 = vsel %vm1768, %v2025, 0
        %2038 = vmatprep.subr.mxu0 %v2011
        %2039 = vmatpush1.msra.mxu0 %v2010
        %2040 = vmatprep.subr.mxu0 %v2013
        %2041 = vmatpush1.msra.mxu0 %v2012
        %2042 = vmatprep.subr.mxu0 %v2015
        %2043 = vmatpush1.msra.mxu0 %v2014
        %2044 = vmatprep.subr.mxu0 %v2017
        %2045 = vmatpush1.msra.mxu0 %v2016
        %2046 = vmatprep.subr.mxu0 0.0
        %2047 = vmatpush1.msra.mxu0 0.0
        %2048 = vmatprep.subr.mxu0 0.0
        %2049 = vmatpush1.msra.mxu0 0.0
        %2050 = vmatprep.subr.mxu0 0.0
        %2051 = vmatpush1.msra.mxu0 0.0
        %2052 = vmatprep.subr.mxu0 0.0
        %2053 = vmatpush1.msra.mxu0 0.0
        %2054 = vmatprep.subr.mxu0 0.0
        %2055 = vmatpush1.msra.mxu0 0.0
        %2056 = vmatprep.subr.mxu0 0.0
        %2057 = vmatpush1.msra.mxu0 0.0
        %2058 = vmatprep.subr.mxu0 0.0
        %2059 = vmatpush1.msra.mxu0 0.0
        %2060 = vmatprep.subr.mxu0 0.0
        %2061 = vmatpush1.msra.mxu0 0.0
        %2062 = vmatprep.subr.mxu0 0.0
        %2063 = vmatpush1.msra.mxu0 0.0
        %2064 = vmatprep.subr.mxu0 0.0
        %2065 = vmatpush1.msra.mxu0 0.0
        %2066 = vmatprep.subr.mxu0 0.0
        %2067 = vmatpush1.msra.mxu0 0.0
        %2068 = vmatprep.subr.mxu0 0.0
        %2069 = vmatpush1.msra.mxu0 0.0
        %2070 = vmatprep.subr.mxu0 0.0
        %2071 = vmatpush1.msra.mxu0 0.0
        %2072 = vmatprep.subr.mxu0 0.0
        %2073 = vmatpush1.msra.mxu0 0.0
        %2074 = vmatprep.subr.mxu0 0.0
        %2075 = vmatpush1.msra.mxu0 0.0
        %2076 = vmatprep.subr.mxu0 0.0
        %2077 = vmatpush1.msra.mxu0 0.0
        %2078 = vmatprep.subr.mxu0 0.0
        %2079 = vmatpush1.msra.mxu0 0.0
        %2080 = vmatprep.subr.mxu0 0.0
        %2081 = vmatpush1.msra.mxu0 0.0
        %2082 = vmatprep.subr.mxu0 0.0
        %2083 = vmatpush1.msra.mxu0 0.0
        %2084 = vmatprep.subr.mxu0 0.0
        %2085 = vmatpush1.msra.mxu0 0.0
        %2086 = vmatprep.subr.mxu0 0.0
        %2087 = vmatpush1.msra.mxu0 0.0
        %2088 = vmatprep.subr.mxu0 0.0
        %2089 = vmatpush1.msra.mxu0 0.0
        %2090 = vmatprep.subr.mxu0 0.0
        %2091 = vmatpush1.msra.mxu0 0.0
        %2092 = vmatprep.subr.mxu0 0.0
        %2093 = vmatpush1.msra.mxu0 0.0
        %2094 = vmatprep.subr.mxu0 0.0
        %2095 = vmatpush1.msra.mxu0 0.0
        %2096 = vmatprep.subr.mxu0 0.0
        %2097 = vmatpush1.msra.mxu0 0.0
        %2098 = vmatprep.subr.mxu0 0.0
        %2099 = vmatpush1.msra.mxu0 0.0
        %2100 = vmatprep.subr.mxu0 0.0
        %2101 = vmatpush1.msra.mxu0 0.0
        %2102 = vmatprep.mubr.f32.mxu0 0.0
        %2103 = vmatmul.mubr.f32.gmra.mrb[0].mxu0 %v2027
        %v2104 = vpop.f32.mrb[0].mxu0
        %v2105 = vadd.f32 0.0, %v2104
        %v2106 = vpop.f32.mrb[0].mxu0
        %v2107 = vadd.f32 0.0, %v2106
        %2108 = vmatprep.mubr.f32.mxu0 0.0
        %2109 = vmatmul.mubr.f32.gmra.mrb[0].mxu0 %v2030
        %v2110 = vpop.f32.mrb[0].mxu0
        %v2111 = vadd.f32 0.0, %v2110
        %v2112 = vpop.f32.mrb[0].mxu0
        %v2113 = vadd.f32 0.0, %v2112
        %2114 = vmatprep.mubr.f32.mxu0 0.0
        %2115 = vmatmul.mubr.f32.gmra.mrb[0].mxu0 %v2033
        %v2116 = vpop.f32.mrb[0].mxu0
        %v2117 = vadd.f32 0.0, %v2116
        %v2118 = vpop.f32.mrb[0].mxu0
        %v2119 = vadd.f32 0.0, %v2118
        %2120 = vmatprep.mubr.f32.mxu0 0.0
        %2121 = vmatmul.mubr.f32.gmra.mrb[0].mxu0 %v2036
        %v2122 = vpop.f32.mrb[0].mxu0
        %v2123 = vadd.f32 0.0, %v2122
        %v2124 = vpop.f32.mrb[0].mxu0
        %v2125 = vadd.f32 0.0, %v2124
        %2126 = vdwg.mxu0
        %2128 = vset.pattern.permute.xlu0 0
        %2129 = vperm.xlu0 %2128, %v2018
        %v2130 = vpop.permute.xlu0 %2129
        %2133 = vset.pattern.permute.xlu0 0
        %2134 = vperm.xlu0 %2133, %v2019
        %v2135 = vpop.permute.xlu0 %2134
        %2138 = vset.pattern.permute.xlu0 0
        %2139 = vperm.xlu0 %2138, %v2020
        %v2140 = vpop.permute.xlu0 %2139
        %2143 = vset.pattern.permute.xlu0 0
        %2144 = vperm.xlu0 %2143, %v2021
        %v2145 = vpop.permute.xlu0 %2144
        %v2147 = vadd.f32 %v2130, %v2105
        %v2148 = vadd.f32 %v2130, %v2107
        %v2149 = vadd.f32 %v2135, %v2111
        %v2150 = vadd.f32 %v2135, %v2113
        %v2151 = vadd.f32 %v2140, %v2117
        %v2152 = vadd.f32 %v2140, %v2119
        %v2153 = vadd.f32 %v2145, %v2123
        %v2154 = vadd.f32 %v2145, %v2125
        %v2155 = vld [vmem:[%s2 + $0x110] sm:$0xff]
        %v2156 = vld [vmem:[%s2 + $0x118] sm:$0xff]
        %v2157 = vld [vmem:[%s2 + $0x120] sm:$0xff]
        %v2158 = vld [vmem:[%s2 + $0x128] sm:$0xff]
        %v2159 = vld [vmem:[%s2 + $0x130] sm:$0xff]
        %v2160 = vld [vmem:[%s2 + $0x138] sm:$0xff]
        %v2161 = vld [vmem:[%s2 + $0x140] sm:$0xff]
        %v2162 = vld [vmem:[%s2 + $0x148] sm:$0xff]
        %v2164 = vsel %vm1169, %v2159, 0
        %v2167 = vsel %vm1169, %v2160, 0
        %v2170 = vsel %vm1169, %v2161, 0
        %v2173 = vsel %vm1169, %v2162, 0
        %2175 = vmatprep.subr.mxu0 %v536
        %2176 = vmatpush1.msra.mxu0 %v432
        %2177 = vmatprep.subr.mxu0 %v1187
        %2178 = vmatpush1.msra.mxu0 %v1184
        %2179 = vmatprep.subr.mxu0 0.0
        %2180 = vmatpush1.msra.mxu0 0.0
        %2181 = vmatprep.subr.mxu0 0.0
        %2182 = vmatpush1.msra.mxu0 0.0
        %2183 = vmatprep.subr.mxu0 0.0
        %2184 = vmatpush1.msra.mxu0 0.0
        %2185 = vmatprep.subr.mxu0 0.0
        %2186 = vmatpush1.msra.mxu0 0.0
        %2187 = vmatprep.subr.mxu0 0.0
        %2188 = vmatpush1.msra.mxu0 0.0
        %2189 = vmatprep.subr.mxu0 0.0
        %2190 = vmatpush1.msra.mxu0 0.0
        %2191 = vmatprep.subr.mxu0 0.0
        %2192 = vmatpush1.msra.mxu0 0.0
        %2193 = vmatprep.subr.mxu0 0.0
        %2194 = vmatpush1.msra.mxu0 0.0
        %2195 = vmatprep.subr.mxu0 0.0
        %2196 = vmatpush1.msra.mxu0 0.0
        %2197 = vmatprep.subr.mxu0 0.0
        %2198 = vmatpush1.msra.mxu0 0.0
        %2199 = vmatprep.subr.mxu0 0.0
        %2200 = vmatpush1.msra.mxu0 0.0
        %2201 = vmatprep.subr.mxu0 0.0
        %2202 = vmatpush1.msra.mxu0 0.0
        %2203 = vmatprep.subr.mxu0 0.0
        %2204 = vmatpush1.msra.mxu0 0.0
        %2205 = vmatprep.subr.mxu0 0.0
        %2206 = vmatpush1.msra.mxu0 0.0
        %2207 = vmatprep.subr.mxu0 0.0
        %2208 = vmatpush1.msra.mxu0 0.0
        %2209 = vmatprep.subr.mxu0 0.0
        %2210 = vmatpush1.msra.mxu0 0.0
        %2211 = vmatprep.subr.mxu0 0.0
        %2212 = vmatpush1.msra.mxu0 0.0
        %2213 = vmatprep.subr.mxu0 0.0
        %2214 = vmatpush1.msra.mxu0 0.0
        %2215 = vmatprep.subr.mxu0 0.0
        %2216 = vmatpush1.msra.mxu0 0.0
        %2217 = vmatprep.subr.mxu0 0.0
        %2218 = vmatpush1.msra.mxu0 0.0
        %2219 = vmatprep.subr.mxu0 0.0
        %2220 = vmatpush1.msra.mxu0 0.0
        %2221 = vmatprep.subr.mxu0 0.0
        %2222 = vmatpush1.msra.mxu0 0.0
        %2223 = vmatprep.subr.mxu0 0.0
        %2224 = vmatpush1.msra.mxu0 0.0
        %2225 = vmatprep.subr.mxu0 0.0
        %2226 = vmatpush1.msra.mxu0 0.0
        %2227 = vmatprep.subr.mxu0 0.0
        %2228 = vmatpush1.msra.mxu0 0.0
        %2229 = vmatprep.subr.mxu0 0.0
        %2230 = vmatpush1.msra.mxu0 0.0
        %2231 = vmatprep.subr.mxu0 0.0
        %2232 = vmatpush1.msra.mxu0 0.0
        %2233 = vmatprep.subr.mxu0 0.0
        %2234 = vmatpush1.msra.mxu0 0.0
        %2235 = vmatprep.subr.mxu0 0.0
        %2236 = vmatpush1.msra.mxu0 0.0
        %2237 = vmatprep.subr.mxu0 0.0
        %2238 = vmatpush1.msra.mxu0 0.0
        %2239 = vmatprep.mubr.f32.mxu0 0.0
        %2240 = vmatmul.mubr.f32.gmra.mrb[0].mxu0 %v2164
        %v2241 = vpop.f32.mrb[0].mxu0
        %v2242 = vadd.f32 0.0, %v2241
        %v2243 = vpop.f32.mrb[0].mxu0
        %v2244 = vadd.f32 0.0, %v2243
        %2245 = vmatprep.mubr.f32.mxu0 0.0
        %2246 = vmatmul.mubr.f32.gmra.mrb[0].mxu0 %v2167
        %v2247 = vpop.f32.mrb[0].mxu0
        %v2248 = vadd.f32 0.0, %v2247
        %v2249 = vpop.f32.mrb[0].mxu0
        %v2250 = vadd.f32 0.0, %v2249
        %2251 = vmatprep.mubr.f32.mxu0 0.0
        %2252 = vmatmul.mubr.f32.gmra.mrb[0].mxu0 %v2170
        %v2253 = vpop.f32.mrb[0].mxu0
        %v2254 = vadd.f32 0.0, %v2253
        %v2255 = vpop.f32.mrb[0].mxu0
        %v2256 = vadd.f32 0.0, %v2255
        %2257 = vmatprep.mubr.f32.mxu0 0.0
        %2258 = vmatmul.mubr.f32.gmra.mrb[0].mxu0 %v2173
        %v2259 = vpop.f32.mrb[0].mxu0
        %v2260 = vadd.f32 0.0, %v2259
        %v2261 = vpop.f32.mrb[0].mxu0
        %v2262 = vadd.f32 0.0, %v2261
        %2263 = vdwg.mxu0
        %v2265 = vsel %vm238, %v2155, 0
        %v2268 = vsel %vm238, %v2156, 0
        %v2271 = vsel %vm238, %v2157, 0
        %v2274 = vsel %vm238, %v2158, 0
        %2276 = vmatprep.subr.mxu0 %v250
        %2277 = vmatpush1.msra.mxu0 %v247
        %2278 = vmatprep.subr.mxu0 0.0
        %2279 = vmatpush1.msra.mxu0 0.0
        %2280 = vmatprep.subr.mxu0 0.0
        %2281 = vmatpush1.msra.mxu0 0.0
        %2282 = vmatprep.subr.mxu0 0.0
        %2283 = vmatpush1.msra.mxu0 0.0
        %2284 = vmatprep.subr.mxu0 0.0
        %2285 = vmatpush1.msra.mxu0 0.0
        %2286 = vmatprep.subr.mxu0 0.0
        %2287 = vmatpush1.msra.mxu0 0.0
        %2288 = vmatprep.subr.mxu0 0.0
        %2289 = vmatpush1.msra.mxu0 0.0
        %2290 = vmatprep.subr.mxu0 0.0
        %2291 = vmatpush1.msra.mxu0 0.0
        %2292 = vmatprep.subr.mxu0 0.0
        %2293 = vmatpush1.msra.mxu0 0.0
        %2294 = vmatprep.subr.mxu0 0.0
        %2295 = vmatpush1.msra.mxu0 0.0
        %2296 = vmatprep.subr.mxu0 0.0
        %2297 = vmatpush1.msra.mxu0 0.0
        %2298 = vmatprep.subr.mxu0 0.0
        %2299 = vmatpush1.msra.mxu0 0.0
        %2300 = vmatprep.subr.mxu0 0.0
        %2301 = vmatpush1.msra.mxu0 0.0
        %2302 = vmatprep.subr.mxu0 0.0
        %2303 = vmatpush1.msra.mxu0 0.0
        %2304 = vmatprep.subr.mxu0 0.0
        %2305 = vmatpush1.msra.mxu0 0.0
        %2306 = vmatprep.subr.mxu0 0.0
        %2307 = vmatpush1.msra.mxu0 0.0
        %2308 = vmatprep.subr.mxu0 0.0
        %2309 = vmatpush1.msra.mxu0 0.0
        %2310 = vmatprep.subr.mxu0 0.0
        %2311 = vmatpush1.msra.mxu0 0.0
        %2312 = vmatprep.subr.mxu0 0.0
        %2313 = vmatpush1.msra.mxu0 0.0
        %2314 = vmatprep.subr.mxu0 0.0
        %2315 = vmatpush1.msra.mxu0 0.0
        %2316 = vmatprep.subr.mxu0 0.0
        %2317 = vmatpush1.msra.mxu0 0.0
        %2318 = vmatprep.subr.mxu0 0.0
        %2319 = vmatpush1.msra.mxu0 0.0
        %2320 = vmatprep.subr.mxu0 0.0
        %2321 = vmatpush1.msra.mxu0 0.0
        %2322 = vmatprep.subr.mxu0 0.0
        %2323 = vmatpush1.msra.mxu0 0.0
        %2324 = vmatprep.subr.mxu0 0.0
        %2325 = vmatpush1.msra.mxu0 0.0
        %2326 = vmatprep.subr.mxu0 0.0
        %2327 = vmatpush1.msra.mxu0 0.0
        %2328 = vmatprep.subr.mxu0 0.0
        %2329 = vmatpush1.msra.mxu0 0.0
        %2330 = vmatprep.subr.mxu0 0.0
        %2331 = vmatpush1.msra.mxu0 0.0
        %2332 = vmatprep.subr.mxu0 0.0
        %2333 = vmatpush1.msra.mxu0 0.0
        %2334 = vmatprep.subr.mxu0 0.0
        %2335 = vmatpush1.msra.mxu0 0.0
        %2336 = vmatprep.subr.mxu0 0.0
        %2337 = vmatpush1.msra.mxu0 0.0
        %2338 = vmatprep.subr.mxu0 0.0
        %2339 = vmatpush1.msra.mxu0 0.0
        %2340 = vmatprep.mubr.f32.mxu0 0.0
        %2341 = vmatmul.mubr.f32.gmra.mrb[0].mxu0 %v2265
        %v2342 = vpop.f32.mrb[0].mxu0
        %v2343 = vadd.f32 %v2242, %v2342
        %v2344 = vpop.f32.mrb[0].mxu0
        %v2345 = vadd.f32 %v2244, %v2344
        %2346 = vmatprep.mubr.f32.mxu0 0.0
        %2347 = vmatmul.mubr.f32.gmra.mrb[0].mxu0 %v2268
        %v2348 = vpop.f32.mrb[0].mxu0
        %v2349 = vadd.f32 %v2248, %v2348
        %v2350 = vpop.f32.mrb[0].mxu0
        %v2351 = vadd.f32 %v2250, %v2350
        %2352 = vmatprep.mubr.f32.mxu0 0.0
        %2353 = vmatmul.mubr.f32.gmra.mrb[0].mxu0 %v2271
        %v2354 = vpop.f32.mrb[0].mxu0
        %v2355 = vadd.f32 %v2254, %v2354
        %v2356 = vpop.f32.mrb[0].mxu0
        %v2357 = vadd.f32 %v2256, %v2356
        %2358 = vmatprep.mubr.f32.mxu0 0.0
        %2359 = vmatmul.mubr.f32.gmra.mrb[0].mxu0 %v2274
        %v2360 = vpop.f32.mrb[0].mxu0
        %v2361 = vadd.f32 %v2260, %v2360
        %v2362 = vpop.f32.mrb[0].mxu0
        %v2363 = vadd.f32 %v2262, %v2362
        %2364 = vdwg.mxu0
        %v2365 = vld [vmem:[%s2 + $0x150] sm:$0xff]
        %v2366 = vld [vmem:[%s2 + $0x158] sm:$0xff]
        %v2367 = vld [vmem:[%s2 + $0x160] sm:$0xff]
        %v2368 = vld [vmem:[%s2 + $0x168] sm:$0xff]
        %v2370 = vsel %vm1169, %v2365, 0
        %v2373 = vsel %vm1169, %v2366, 0
        %v2376 = vsel %vm1169, %v2367, 0
        %v2379 = vsel %vm1169, %v2368, 0
        %2381 = vmatprep.subr.mxu0 %v950
        %2382 = vmatpush1.msra.mxu0 %v847
        %2383 = vmatprep.subr.mxu0 %v1399
        %2384 = vmatpush1.msra.mxu0 %v1396
        %2385 = vmatprep.subr.mxu0 0.0
        %2386 = vmatpush1.msra.mxu0 0.0
        %2387 = vmatprep.subr.mxu0 0.0
        %2388 = vmatpush1.msra.mxu0 0.0
        %2389 = vmatprep.subr.mxu0 0.0
        %2390 = vmatpush1.msra.mxu0 0.0
        %2391 = vmatprep.subr.mxu0 0.0
        %2392 = vmatpush1.msra.mxu0 0.0
        %2393 = vmatprep.subr.mxu0 0.0
        %2394 = vmatpush1.msra.mxu0 0.0
        %2395 = vmatprep.subr.mxu0 0.0
        %2396 = vmatpush1.msra.mxu0 0.0
        %2397 = vmatprep.subr.mxu0 0.0
        %2398 = vmatpush1.msra.mxu0 0.0
        %2399 = vmatprep.subr.mxu0 0.0
        %2400 = vmatpush1.msra.mxu0 0.0
        %2401 = vmatprep.subr.mxu0 0.0
        %2402 = vmatpush1.msra.mxu0 0.0
        %2403 = vmatprep.subr.mxu0 0.0
        %2404 = vmatpush1.msra.mxu0 0.0
        %2405 = vmatprep.subr.mxu0 0.0
        %2406 = vmatpush1.msra.mxu0 0.0
        %2407 = vmatprep.subr.mxu0 0.0
        %2408 = vmatpush1.msra.mxu0 0.0
        %2409 = vmatprep.subr.mxu0 0.0
        %2410 = vmatpush1.msra.mxu0 0.0
        %2411 = vmatprep.subr.mxu0 0.0
        %2412 = vmatpush1.msra.mxu0 0.0
        %2413 = vmatprep.subr.mxu0 0.0
        %2414 = vmatpush1.msra.mxu0 0.0
        %2415 = vmatprep.subr.mxu0 0.0
        %2416 = vmatpush1.msra.mxu0 0.0
        %2417 = vmatprep.subr.mxu0 0.0
        %2418 = vmatpush1.msra.mxu0 0.0
        %2419 = vmatprep.subr.mxu0 0.0
        %2420 = vmatpush1.msra.mxu0 0.0
        %2421 = vmatprep.subr.mxu0 0.0
        %2422 = vmatpush1.msra.mxu0 0.0
        %2423 = vmatprep.subr.mxu0 0.0
        %2424 = vmatpush1.msra.mxu0 0.0
        %2425 = vmatprep.subr.mxu0 0.0
        %2426 = vmatpush1.msra.mxu0 0.0
        %2427 = vmatprep.subr.mxu0 0.0
        %2428 = vmatpush1.msra.mxu0 0.0
        %2429 = vmatprep.subr.mxu0 0.0
        %2430 = vmatpush1.msra.mxu0 0.0
        %2431 = vmatprep.subr.mxu0 0.0
        %2432 = vmatpush1.msra.mxu0 0.0
        %2433 = vmatprep.subr.mxu0 0.0
        %2434 = vmatpush1.msra.mxu0 0.0
        %2435 = vmatprep.subr.mxu0 0.0
        %2436 = vmatpush1.msra.mxu0 0.0
        %2437 = vmatprep.subr.mxu0 0.0
        %2438 = vmatpush1.msra.mxu0 0.0
        %2439 = vmatprep.subr.mxu0 0.0
        %2440 = vmatpush1.msra.mxu0 0.0
        %2441 = vmatprep.subr.mxu0 0.0
        %2442 = vmatpush1.msra.mxu0 0.0
        %2443 = vmatprep.subr.mxu0 0.0
        %2444 = vmatpush1.msra.mxu0 0.0
        %2445 = vmatprep.mubr.f32.mxu0 0.0
        %2446 = vmatmul.mubr.f32.gmra.mrb[0].mxu0 %v2370
        %v2447 = vpop.f32.mrb[0].mxu0
        %v2448 = vadd.f32 0.0, %v2447
        %v2449 = vpop.f32.mrb[0].mxu0
        %v2450 = vadd.f32 0.0, %v2449
        %2451 = vmatprep.mubr.f32.mxu0 0.0
        %2452 = vmatmul.mubr.f32.gmra.mrb[0].mxu0 %v2373
        %v2453 = vpop.f32.mrb[0].mxu0
        %v2454 = vadd.f32 0.0, %v2453
        %v2455 = vpop.f32.mrb[0].mxu0
        %v2456 = vadd.f32 0.0, %v2455
        %2457 = vmatprep.mubr.f32.mxu0 0.0
        %2458 = vmatmul.mubr.f32.gmra.mrb[0].mxu0 %v2376
        %v2459 = vpop.f32.mrb[0].mxu0
        %v2460 = vadd.f32 0.0, %v2459
        %v2461 = vpop.f32.mrb[0].mxu0
        %v2462 = vadd.f32 0.0, %v2461
        %2463 = vmatprep.mubr.f32.mxu0 0.0
        %2464 = vmatmul.mubr.f32.gmra.mrb[0].mxu0 %v2379
        %v2465 = vpop.f32.mrb[0].mxu0
        %v2466 = vadd.f32 0.0, %v2465
        %v2467 = vpop.f32.mrb[0].mxu0
        %v2468 = vadd.f32 0.0, %v2467
        %2469 = vdwg.mxu0
        %v2470 = vadd.f32 %v2343, %v2448
        %v2471 = vadd.f32 %v2345, %v2450
        %v2472 = vadd.f32 %v2349, %v2454
        %v2473 = vadd.f32 %v2351, %v2456
        %v2474 = vadd.f32 %v2355, %v2460
        %v2475 = vadd.f32 %v2357, %v2462
        %v2476 = vadd.f32 %v2361, %v2466
        %v2477 = vadd.f32 %v2363, %v2468
        %v2478 = vld [vmem:[%s2 + $0x170] sm:$0xff]
        %v2479 = vld [vmem:[%s2 + $0x178] sm:$0xff]
        %v2480 = vld [vmem:[%s2 + $0x180] sm:$0xff]
        %v2481 = vld [vmem:[%s2 + $0x188] sm:$0xff]
        %v2483 = vsel %vm1502, %v2478, 0
        %v2486 = vsel %vm1502, %v2479, 0
        %v2489 = vsel %vm1502, %v2480, 0
        %v2492 = vsel %vm1502, %v2481, 0
        %2494 = vmatprep.subr.mxu0 %v233
        %2495 = vmatpush1.msra.mxu0 %v232
        %2496 = vmatprep.subr.mxu0 %v235
        %2497 = vmatpush1.msra.mxu0 %v234
        %2498 = vmatprep.subr.mxu0 0.0
        %2499 = vmatpush1.msra.mxu0 0.0
        %2500 = vmatprep.subr.mxu0 0.0
        %2501 = vmatpush1.msra.mxu0 0.0
        %2502 = vmatprep.subr.mxu0 0.0
        %2503 = vmatpush1.msra.mxu0 0.0
        %2504 = vmatprep.subr.mxu0 0.0
        %2505 = vmatpush1.msra.mxu0 0.0
        %2506 = vmatprep.subr.mxu0 0.0
        %2507 = vmatpush1.msra.mxu0 0.0
        %2508 = vmatprep.subr.mxu0 0.0
        %2509 = vmatpush1.msra.mxu0 0.0
        %2510 = vmatprep.subr.mxu0 0.0
        %2511 = vmatpush1.msra.mxu0 0.0
        %2512 = vmatprep.subr.mxu0 0.0
        %2513 = vmatpush1.msra.mxu0 0.0
        %2514 = vmatprep.subr.mxu0 0.0
        %2515 = vmatpush1.msra.mxu0 0.0
        %2516 = vmatprep.subr.mxu0 0.0
        %2517 = vmatpush1.msra.mxu0 0.0
        %2518 = vmatprep.subr.mxu0 0.0
        %2519 = vmatpush1.msra.mxu0 0.0
        %2520 = vmatprep.subr.mxu0 0.0
        %2521 = vmatpush1.msra.mxu0 0.0
        %2522 = vmatprep.subr.mxu0 0.0
        %2523 = vmatpush1.msra.mxu0 0.0
        %2524 = vmatprep.subr.mxu0 0.0
        %2525 = vmatpush1.msra.mxu0 0.0
        %2526 = vmatprep.subr.mxu0 0.0
        %2527 = vmatpush1.msra.mxu0 0.0
        %2528 = vmatprep.subr.mxu0 0.0
        %2529 = vmatpush1.msra.mxu0 0.0
        %2530 = vmatprep.subr.mxu0 0.0
        %2531 = vmatpush1.msra.mxu0 0.0
        %2532 = vmatprep.subr.mxu0 0.0
        %2533 = vmatpush1.msra.mxu0 0.0
        %2534 = vmatprep.subr.mxu0 0.0
        %2535 = vmatpush1.msra.mxu0 0.0
        %2536 = vmatprep.subr.mxu0 0.0
        %2537 = vmatpush1.msra.mxu0 0.0
        %2538 = vmatprep.subr.mxu0 0.0
        %2539 = vmatpush1.msra.mxu0 0.0
        %2540 = vmatprep.subr.mxu0 0.0
        %2541 = vmatpush1.msra.mxu0 0.0
        %2542 = vmatprep.subr.mxu0 0.0
        %2543 = vmatpush1.msra.mxu0 0.0
        %2544 = vmatprep.subr.mxu0 0.0
        %2545 = vmatpush1.msra.mxu0 0.0
        %2546 = vmatprep.subr.mxu0 0.0
        %2547 = vmatpush1.msra.mxu0 0.0
        %2548 = vmatprep.subr.mxu0 0.0
        %2549 = vmatpush1.msra.mxu0 0.0
        %2550 = vmatprep.subr.mxu0 0.0
        %2551 = vmatpush1.msra.mxu0 0.0
        %2552 = vmatprep.subr.mxu0 0.0
        %2553 = vmatpush1.msra.mxu0 0.0
        %2554 = vmatprep.subr.mxu0 0.0
        %2555 = vmatpush1.msra.mxu0 0.0
        %2556 = vmatprep.subr.mxu0 0.0
        %2557 = vmatpush1.msra.mxu0 0.0
        %2558 = vmatprep.mubr.f32.mxu0 0.0
        %2559 = vmatmul.mubr.f32.gmra.mrb[0].mxu0 %v2483
        %v2560 = vpop.f32.mrb[0].mxu0
        %v2561 = vadd.f32 0.0, %v2560
        %v2562 = vpop.f32.mrb[0].mxu0
        %v2563 = vadd.f32 0.0, %v2562
        %2564 = vmatprep.mubr.f32.mxu0 0.0
        %2565 = vmatmul.mubr.f32.gmra.mrb[0].mxu0 %v2486
        %v2566 = vpop.f32.mrb[0].mxu0
        %v2567 = vadd.f32 0.0, %v2566
        %v2568 = vpop.f32.mrb[0].mxu0
        %v2569 = vadd.f32 0.0, %v2568
        %2570 = vmatprep.mubr.f32.mxu0 0.0
        %2571 = vmatmul.mubr.f32.gmra.mrb[0].mxu0 %v2489
        %v2572 = vpop.f32.mrb[0].mxu0
        %v2573 = vadd.f32 0.0, %v2572
        %v2574 = vpop.f32.mrb[0].mxu0
        %v2575 = vadd.f32 0.0, %v2574
        %2576 = vmatprep.mubr.f32.mxu0 0.0
        %2577 = vmatmul.mubr.f32.gmra.mrb[0].mxu0 %v2492
        %v2578 = vpop.f32.mrb[0].mxu0
        %v2579 = vadd.f32 0.0, %v2578
        %v2580 = vpop.f32.mrb[0].mxu0
        %v2581 = vadd.f32 0.0, %v2580
        %2582 = vdwg.mxu0
        %v2583 = vadd.f32 %v2470, %v2561
        %v2584 = vadd.f32 %v2471, %v2563
        %v2585 = vadd.f32 %v2472, %v2567
        %v2586 = vadd.f32 %v2473, %v2569
        %v2587 = vadd.f32 %v2474, %v2573
        %v2588 = vadd.f32 %v2475, %v2575
        %v2589 = vadd.f32 %v2476, %v2579
        %v2590 = vadd.f32 %v2477, %v2581
        %v2591 = vadd.f32 %v2147, %v2583
        %v2592 = vadd.f32 %v2148, %v2584
        %v2593 = vadd.f32 %v2149, %v2585
        %v2594 = vadd.f32 %v2150, %v2586
        %v2595 = vadd.f32 %v2151, %v2587
        %v2596 = vadd.f32 %v2152, %v2588
        %v2597 = vadd.f32 %v2153, %v2589
        %v2598 = vadd.f32 %v2154, %v2590
        %v2599 = vmul.f32 %v2591, 100.0
        %v2600 = vmul.f32 %v2592, 100.0
        %v2601 = vmul.f32 %v2593, 100.0
        %v2602 = vmul.f32 %v2594, 100.0
        %v2603 = vmul.f32 %v2595, 100.0
        %v2604 = vmul.f32 %v2596, 100.0
        %v2605 = vmul.f32 %v2597, 100.0
        %v2606 = vmul.f32 %v2598, 100.0
        %vm2607 = vcmp.gt.f32.partialorder %v2599, 20.0
        %vm2608 = vcmp.gt.f32.partialorder %v2600, 20.0
        %vm2609 = vcmp.gt.f32.partialorder %v2601, 20.0
        %vm2610 = vcmp.gt.f32.partialorder %v2602, 20.0
        %vm2611 = vcmp.gt.f32.partialorder %v2603, 20.0
        %vm2612 = vcmp.gt.f32.partialorder %v2604, 20.0
        %vm2613 = vcmp.gt.f32.partialorder %v2605, 20.0
        %vm2614 = vcmp.gt.f32.partialorder %v2606, 20.0
        %v2615 = vmul.f32 %v2599, 1.442695
        %v2616 = vpow.pop %v2615
        %v2617 = vmul.f32 %v2600, 1.442695
        %v2618 = vpow.pop %v2617
        %v2619 = vmul.f32 %v2601, 1.442695
        %v2620 = vpow.pop %v2619
        %v2621 = vmul.f32 %v2602, 1.442695
        %v2622 = vpow.pop %v2621
        %v2623 = vmul.f32 %v2603, 1.442695
        %v2624 = vpow.pop %v2623
        %v2625 = vmul.f32 %v2604, 1.442695
        %v2626 = vpow.pop %v2625
        %v2627 = vmul.f32 %v2605, 1.442695
        %v2628 = vpow.pop %v2627
        %v2629 = vmul.f32 %v2606, 1.442695
        %v2630 = vpow.pop %v2629
        %v2631 = vadd.f32 %v2616, 1.0
        %v2632 = vlog2.pop %v2631
        %v2633 = vmul.f32 %v2632, 0.6931472
        %v2634 = vmul.f32 -0.5, %v2616
        %v2635 = vadd.f32 %v2634, 1.0
        %v2636 = vmul.f32 %v2635, %v2616
        %v2637 = vand.u32 2147483647, %v2616
        %vm2638 = vcmp.lt.f32.partialorder %v2637, 0.0004427343
        %v2639 = vsel %vm2638, %v2636, %v2633
        %v2640 = vadd.f32 %v2618, 1.0
        %v2641 = vlog2.pop %v2640
        %v2642 = vmul.f32 %v2641, 0.6931472
        %v2643 = vmul.f32 -0.5, %v2618
        %v2644 = vadd.f32 %v2643, 1.0
        %v2645 = vmul.f32 %v2644, %v2618
        %v2646 = vand.u32 2147483647, %v2618
        %vm2647 = vcmp.lt.f32.partialorder %v2646, 0.0004427343
        %v2648 = vsel %vm2647, %v2645, %v2642
        %v2649 = vadd.f32 %v2620, 1.0
        %v2650 = vlog2.pop %v2649
        %v2651 = vmul.f32 %v2650, 0.6931472
        %v2652 = vmul.f32 -0.5, %v2620
        %v2653 = vadd.f32 %v2652, 1.0
        %v2654 = vmul.f32 %v2653, %v2620
        %v2655 = vand.u32 2147483647, %v2620
        %vm2656 = vcmp.lt.f32.partialorder %v2655, 0.0004427343
        %v2657 = vsel %vm2656, %v2654, %v2651
        %v2658 = vadd.f32 %v2622, 1.0
        %v2659 = vlog2.pop %v2658
        %v2660 = vmul.f32 %v2659, 0.6931472
        %v2661 = vmul.f32 -0.5, %v2622
        %v2662 = vadd.f32 %v2661, 1.0
        %v2663 = vmul.f32 %v2662, %v2622
        %v2664 = vand.u32 2147483647, %v2622
        %vm2665 = vcmp.lt.f32.partialorder %v2664, 0.0004427343
        %v2666 = vsel %vm2665, %v2663, %v2660
        %v2667 = vadd.f32 %v2624, 1.0
        %v2668 = vlog2.pop %v2667
        %v2669 = vmul.f32 %v2668, 0.6931472
        %v2670 = vmul.f32 -0.5, %v2624
        %v2671 = vadd.f32 %v2670, 1.0
        %v2672 = vmul.f32 %v2671, %v2624
        %v2673 = vand.u32 2147483647, %v2624
        %vm2674 = vcmp.lt.f32.partialorder %v2673, 0.0004427343
        %v2675 = vsel %vm2674, %v2672, %v2669
        %v2676 = vadd.f32 %v2626, 1.0
        %v2677 = vlog2.pop %v2676
        %v2678 = vmul.f32 %v2677, 0.6931472
        %v2679 = vmul.f32 -0.5, %v2626
        %v2680 = vadd.f32 %v2679, 1.0
        %v2681 = vmul.f32 %v2680, %v2626
        %v2682 = vand.u32 2147483647, %v2626
        %vm2683 = vcmp.lt.f32.partialorder %v2682, 0.0004427343
        %v2684 = vsel %vm2683, %v2681, %v2678
        %v2685 = vadd.f32 %v2628, 1.0
        %v2686 = vlog2.pop %v2685
        %v2687 = vmul.f32 %v2686, 0.6931472
        %v2688 = vmul.f32 -0.5, %v2628
        %v2689 = vadd.f32 %v2688, 1.0
        %v2690 = vmul.f32 %v2689, %v2628
        %v2691 = vand.u32 2147483647, %v2628
        %vm2692 = vcmp.lt.f32.partialorder %v2691, 0.0004427343
        %v2693 = vsel %vm2692, %v2690, %v2687
        %v2694 = vadd.f32 %v2630, 1.0
        %v2695 = vlog2.pop %v2694
        %v2696 = vmul.f32 %v2695, 0.6931472
        %v2697 = vmul.f32 -0.5, %v2630
        %v2698 = vadd.f32 %v2697, 1.0
        %v2699 = vmul.f32 %v2698, %v2630
        %v2700 = vand.u32 2147483647, %v2630
        %vm2701 = vcmp.lt.f32.partialorder %v2700, 0.0004427343
        %v2702 = vsel %vm2701, %v2699, %v2696
        %v2703 = vmul.f32 %v2639, 0.01
        %v2704 = vmul.f32 %v2648, 0.01
        %v2705 = vmul.f32 %v2657, 0.01
        %v2706 = vmul.f32 %v2666, 0.01
        %v2707 = vmul.f32 %v2675, 0.01
        %v2708 = vmul.f32 %v2684, 0.01
        %v2709 = vmul.f32 %v2693, 0.01
        %v2710 = vmul.f32 %v2702, 0.01
        %v2711 = vsel %vm2607, %v2591, %v2703
        %v2712 = vsel %vm2608, %v2592, %v2704
        %v2713 = vsel %vm2609, %v2593, %v2705
        %v2714 = vsel %vm2610, %v2594, %v2706
        %v2715 = vsel %vm2611, %v2595, %v2707
        %v2716 = vsel %vm2612, %v2596, %v2708
        %v2717 = vsel %vm2613, %v2597, %v2709
        %v2718 = vsel %vm2614, %v2598, %v2710
        %v2719 = vld [vmem:[%s2 + $0x1b0] sm:$0xff]
        %v2720 = vld [vmem:[%s2 + $0x1b8] sm:$0xff]
        %v2721 = vld [vmem:[%s2 + $0x1c0] sm:$0xff]
        %v2722 = vld [vmem:[%s2 + $0x1c8] sm:$0xff]
        %v2723 = vld [vmem:[%s2 + $0x1d0] sm:$0x1]
        %v2724 = vld [vmem:[%s2 + $0x1d8] sm:$0xff]
        %v2725 = vld [vmem:[%s2 + $0x1e0] sm:$0xff]
        %v2726 = vld [vmem:[%s2 + $0x1e8] sm:$0xff]
        %v2727 = vld [vmem:[%s2 + $0x1f0] sm:$0xff]
        %v2728 = vld [vmem:[%s2 + $0x1f8] sm:$0x1]
        %2730 = vset.pattern.permute.xlu0 0
        %2731 = vperm.xlu0 %2730, %v2724
        %v2732 = vpop.permute.xlu0 %2731
        %2735 = vset.pattern.permute.xlu0 0
        %2736 = vperm.xlu0 %2735, %v2725
        %v2737 = vpop.permute.xlu0 %2736
        %2740 = vset.pattern.permute.xlu0 0
        %2741 = vperm.xlu0 %2740, %v2726
        %v2742 = vpop.permute.xlu0 %2741
        %2745 = vset.pattern.permute.xlu0 0
        %2746 = vperm.xlu0 %2745, %v2727
        %v2747 = vpop.permute.xlu0 %2746
        %2750 = vset.pattern.permute.xlu0 0
        %2751 = vperm.xlu0 %2750, %v2728
        %v2752 = vpop.permute.xlu0 %2751
        %v2755 = vsel %vm1768, %v2719, 0
        %v2758 = vsel %vm1768, %v2720, 0
        %v2761 = vsel %vm1768, %v2721, 0
        %v2764 = vsel %vm1768, %v2722, 0
        %v2767 = vsel %vm1768, %v2723, 0
        %2769 = vmatprep.subr.mxu0 %v2712
        %2770 = vmatpush1.msra.mxu0 %v2711
        %2771 = vmatprep.subr.mxu0 %v2714
        %2772 = vmatpush1.msra.mxu0 %v2713
        %2773 = vmatprep.subr.mxu0 %v2716
        %2774 = vmatpush1.msra.mxu0 %v2715
        %2775 = vmatprep.subr.mxu0 %v2718
        %2776 = vmatpush1.msra.mxu0 %v2717
        %2777 = vmatprep.subr.mxu0 0.0
        %2778 = vmatpush1.msra.mxu0 0.0
        %2779 = vmatprep.subr.mxu0 0.0
        %2780 = vmatpush1.msra.mxu0 0.0
        %2781 = vmatprep.subr.mxu0 0.0
        %2782 = vmatpush1.msra.mxu0 0.0
        %2783 = vmatprep.subr.mxu0 0.0
        %2784 = vmatpush1.msra.mxu0 0.0
        %2785 = vmatprep.subr.mxu0 0.0
        %2786 = vmatpush1.msra.mxu0 0.0
        %2787 = vmatprep.subr.mxu0 0.0
        %2788 = vmatpush1.msra.mxu0 0.0
        %2789 = vmatprep.subr.mxu0 0.0
        %2790 = vmatpush1.msra.mxu0 0.0
        %2791 = vmatprep.subr.mxu0 0.0
        %2792 = vmatpush1.msra.mxu0 0.0
        %2793 = vmatprep.subr.mxu0 0.0
        %2794 = vmatpush1.msra.mxu0 0.0
        %2795 = vmatprep.subr.mxu0 0.0
        %2796 = vmatpush1.msra.mxu0 0.0
        %2797 = vmatprep.subr.mxu0 0.0
        %2798 = vmatpush1.msra.mxu0 0.0
        %2799 = vmatprep.subr.mxu0 0.0
        %2800 = vmatpush1.msra.mxu0 0.0
        %2801 = vmatprep.subr.mxu0 0.0
        %2802 = vmatpush1.msra.mxu0 0.0
        %2803 = vmatprep.subr.mxu0 0.0
        %2804 = vmatpush1.msra.mxu0 0.0
        %2805 = vmatprep.subr.mxu0 0.0
        %2806 = vmatpush1.msra.mxu0 0.0
        %2807 = vmatprep.subr.mxu0 0.0
        %2808 = vmatpush1.msra.mxu0 0.0
        %2809 = vmatprep.subr.mxu0 0.0
        %2810 = vmatpush1.msra.mxu0 0.0
        %2811 = vmatprep.subr.mxu0 0.0
        %2812 = vmatpush1.msra.mxu0 0.0
        %2813 = vmatprep.subr.mxu0 0.0
        %2814 = vmatpush1.msra.mxu0 0.0
        %2815 = vmatprep.subr.mxu0 0.0
        %2816 = vmatpush1.msra.mxu0 0.0
        %2817 = vmatprep.subr.mxu0 0.0
        %2818 = vmatpush1.msra.mxu0 0.0
        %2819 = vmatprep.subr.mxu0 0.0
        %2820 = vmatpush1.msra.mxu0 0.0
        %2821 = vmatprep.subr.mxu0 0.0
        %2822 = vmatpush1.msra.mxu0 0.0
        %2823 = vmatprep.subr.mxu0 0.0
        %2824 = vmatpush1.msra.mxu0 0.0
        %2825 = vmatprep.subr.mxu0 0.0
        %2826 = vmatpush1.msra.mxu0 0.0
        %2827 = vmatprep.subr.mxu0 0.0
        %2828 = vmatpush1.msra.mxu0 0.0
        %2829 = vmatprep.subr.mxu0 0.0
        %2830 = vmatpush1.msra.mxu0 0.0
        %2831 = vmatprep.subr.mxu0 0.0
        %2832 = vmatpush1.msra.mxu0 0.0
        %2833 = vmatprep.mubr.f32.mxu0 0.0
        %2834 = vmatmul.mubr.f32.gmra.mrb[0].mxu0 %v2755
        %v2835 = vpop.f32.mrb[0].mxu0
        %v2836 = vadd.f32 %v2732, %v2835
        %v2837 = vpop.f32.mrb[0].mxu0
        %v2838 = vadd.f32 %v2732, %v2837
        %2839 = vmatprep.mubr.f32.mxu0 0.0
        %2840 = vmatmul.mubr.f32.gmra.mrb[0].mxu0 %v2758
        %v2841 = vpop.f32.mrb[0].mxu0
        %v2842 = vadd.f32 %v2737, %v2841
        %v2843 = vpop.f32.mrb[0].mxu0
        %v2844 = vadd.f32 %v2737, %v2843
        %2845 = vmatprep.mubr.f32.mxu0 0.0
        %2846 = vmatmul.mubr.f32.gmra.mrb[0].mxu0 %v2761
        %v2847 = vpop.f32.mrb[0].mxu0
        %v2848 = vadd.f32 %v2742, %v2847
        %v2849 = vpop.f32.mrb[0].mxu0
        %v2850 = vadd.f32 %v2742, %v2849
        %2851 = vmatprep.mubr.f32.mxu0 0.0
        %2852 = vmatmul.mubr.f32.gmra.mrb[0].mxu0 %v2764
        %v2853 = vpop.f32.mrb[0].mxu0
        %v2854 = vadd.f32 %v2747, %v2853
        %v2855 = vpop.f32.mrb[0].mxu0
        %v2856 = vadd.f32 %v2747, %v2855
        %2857 = vmatprep.mubr.f32.mxu0 0.0
        %2858 = vmatmul.mubr.f32.gmra.mrb[0].mxu0 %v2767
        %v2859 = vpop.f32.mrb[0].mxu0
        %v2860 = vadd.f32 %v2752, %v2859
        %v2861 = vpop.f32.mrb[0].mxu0
        %v2862 = vadd.f32 %v2752, %v2861
        %2863 = vdwg.mxu0
        %2864 = vst [vmem:[%s210] sm:$0xff] %v2836
        %2865 = vst [vmem:[%s210 + $0x8] sm:$0xff] %v2838
        %2866 = vst [vmem:[%s210 + $0x10] sm:$0xff] %v2842
        %2867 = vst [vmem:[%s210 + $0x18] sm:$0xff] %v2844
        %2868 = vst [vmem:[%s210 + $0x20] sm:$0xff] %v2848
        %2869 = vst [vmem:[%s210 + $0x28] sm:$0xff] %v2850
        %2870 = vst [vmem:[%s210 + $0x30] sm:$0xff] %v2854
        %2871 = vst [vmem:[%s210 + $0x38] sm:$0xff] %v2856
        %2872 = vst [vmem:[%s210 + $0x40] sm:$0x1] %v2860
        %2873 = vst [vmem:[%s210 + $0x48] sm:$0x1] %v2862
        %s2874 = sand.u32 %s98, 1
        %s2875 = scalar_lea.sflag [#allocation4], %s2874
        %s2876 = sand.u32 %s98, 1
        %s2877 = smul.addr %s2876, 80
        %s2878 = scalar_lea.vmem [#allocation3], %s2877
        // Predicated region
        $region56: #{tpu_custom_call.1} parent=50 // pred_check
          %p2879 = pneg %p108
        $region57: #{tpu_custom_call.1} parent=50 // pred_check_branch
          %2881 = sbr.rel (%p2879) target = $region59
        $region58: #{tpu_custom_call.1} parent=50 // pred_region
          %s2882 = smul.u32 2, %s17
          %s2884 = ssub.s32 1280, 1280
          %2885 = vsyncadd %s2875, %s2884
          %s2886 = smul.addr %s2882, 128
          %s2887 = scalar_lea.hbm %s3, %s2886
          %s2888 = sshll.u32 %s2878, 4
          %s2889 = int_to_ptr.vmem [resolvable:$true] %s2888
          %2894 = dma.vmem_to_hbm [thread:$0]  %s2889, 1280, %s2887, %s2875, 256, 2048, 16
        $region59: #{tpu_custom_call.1} parent=50 // pred_fallthru
          _
      $region51: #{tpu_custom_call.1} parent=5 // pred_fallthru
        _
      %p2895 = scmp.le.s32.totalorder 2, %s12
      // Predicated region
      $region60: #{tpu_custom_call.1} parent=5 // pred_check
        %p2896 = pneg %p2895
      $region61: #{tpu_custom_call.1} parent=5 // pred_check_branch
        %2898 = sbr.rel (%p2896) target = $region63
      $region62: #{tpu_custom_call.1} parent=5 // pred_region
        %s2899 = ssub.s32 %s12, 2
        // Predicated region
        $region64: #{tpu_custom_call.1} parent=62 // pred_check
          %p2900 = pneg %p114
        $region65: #{tpu_custom_call.1} parent=62 // pred_check_branch
          %2902 = sbr.rel (%p2900) target = $region67
        $region66: #{tpu_custom_call.1} parent=62 // pred_region
          %s2903 = sand.u32 %s99, 1
          %s2904 = scalar_lea.sflag [#allocation4], %s2903
          %s2905 = sand.u32 %s99, 1
          %s2906 = smul.addr %s2905, 80
          %s2907 = scalar_lea.vmem [#allocation3], %s2906
          %2908 = dma.done %s2904, 1280
        $region67: #{tpu_custom_call.1} parent=62 // pred_fallthru
          _
      $region63: #{tpu_custom_call.1} parent=5 // pred_fallthru
        _
    $region6: #{tpu_custom_call.1} parent=1 // loop_footer
      %s16 = sadd.s32 1, %s12
    $region7: #{tpu_custom_call.1} parent=1 // loop_footer_branch
      %11 = sbr.rel target = $region3
    $region8: #{tpu_custom_call.1} parent=1 // loop_exit
      _
    %2909 = vsyncpa [#allocation4], 1
    %s2910 = scalar_lea.sflag [#allocation4], 1
    %2911 = vsyncpa %s2910, 1

</llo_original>
